<compile_context>
chip_gen: v5e
topology: v5e:2x2
jax: 0.10.0
libtpu: 0.0.40
codegen_flags: <defaults>
</compile_context>

<pallas_src>
import functools

import jax
import jax.numpy as jnp
from jax.experimental import pallas as pl
from jax.experimental.pallas import tpu as pltpu


def _round_up(n, m):
    return ((n + m - 1) // m) * m


def _gru_predictor_kernel(*refs, T, bt, H, Dl, Din, num_layers):
    # refs layout:
    #   inputs : inp [T,bt,Din], x [T,bt,Dl], h0 [L,bt,H],
    #            per layer l: w_ih [in_l,3H], w_hh [H,3H], b_gi [1,3H], b_hn [1,H],
    #            w_head [H,2Dl], b_head [1,2Dl]
    #   outputs: out [T,bt,2Dl], hN [L,bt,H]
    #   scratch: gi_scr [T*bt,3H], seq_scr [T*bt,H]  (2D -> reshapes are no-ops)
    n_in = 3 + 4 * num_layers + 2
    inp_ref = refs[0]
    x_ref = refs[1]
    h0_ref = refs[2]
    layer_refs = [refs[3 + 4 * l: 3 + 4 * l + 4] for l in range(num_layers)]
    w_head_ref = refs[n_in - 2]
    b_head_ref = refs[n_in - 1]
    out_ref = refs[n_in]
    hN_ref = refs[n_in + 1]
    gi_scr, seq_scr = refs[n_in + 2], refs[n_in + 3]

    for l in range(num_layers):            # static unroll over layers
        w_ih_ref, w_hh_ref, b_gi_ref, b_hn_ref = layer_refs[l]

        if l == 0:
            xin = inp_ref[...].reshape(T * bt, Din)   # layout no-op (bt % 8 == 0)
        else:
            xin = seq_scr[...]                        # previous layer output [T*bt, H]

        # Hoisted input-side gate pass: ONE fused [T*bt, in_l] @ [in_l, 3H]
        # matmul (gates packed r|z|n along lanes), one lane-dense scratch write.
        # b_ih (+ folded b_hh for the r/z gates) is already included in b_gi.
        gi_scr[...] = (jnp.dot(xin, w_ih_ref[...],
                               preferred_element_type=jnp.float32)
                       + b_gi_ref[...])

        whh = w_hh_ref[...]                # [H, 3H], loaded once per layer
        b_hn = b_hn_ref[...]               # [1, H]

        h = h0_ref[l]                      # [bt, H], carried in vregs
        # Fully unrolled time loop (T is a small static constant).
        # TODO(synk): switch to lax.fori_loop(..., unroll=4) if T grows past ~16
        #             (a static Python loop does not bound vreg live ranges).
        for t in range(T):
            # Single fused MXU op on the serial h -> h critical path.
            gh = jnp.dot(h, whh, preferred_element_type=jnp.float32)   # [bt, 3H]
            gi = gi_scr[pl.ds(t * bt, bt), :]                          # [bt, 3H]
            g = gi + gh
            r = jax.nn.sigmoid(g[:, :H])
            z = jax.nn.sigmoid(g[:, H:2 * H])
            n = jnp.tanh(gi[:, 2 * H:] + r * (gh[:, 2 * H:] + b_hn))
            h = (1.0 - z) * n + z * h
            seq_scr[pl.ds(t * bt, bt), :] = h          # becomes next layer's input

        hN_ref[l] = h                      # written once per layer

    # Fused output head on the top-layer sequence output: one matmul, one
    # packed (mean | std) store.  Residual add only on the mean lanes,
    # softplus only on the std lanes.
    pred = seq_scr[...]                                           # [T*bt, H]
    head = (jnp.dot(pred, w_head_ref[...], preferred_element_type=jnp.float32)
            + b_head_ref[...])                                    # [T*bt, 2Dl]
    mean = head[:, :Dl] + x_ref[...].reshape(T * bt, Dl)
    std = jax.nn.softplus(head[:, Dl:]) + 1e-6
    out_ref[...] = jnp.concatenate([mean, std], axis=-1).reshape(T, bt, 2 * Dl)


def predictor_gru_forward(x, policy, dyn, params):
    """Pallas implementation of PredictorGRU.forward.

    x:      [T, B, latent_dim]
    policy: [T, B, policy_dim]
    dyn:    [L, B, dynamic_dim]
    Returns (mean [T,B,Dl], std [T,B,Dl], dyn_out [L,B,H]).
    """
    T, B, Dl = x.shape
    Dp = policy.shape[-1]
    L, _, H = dyn.shape
    Din = Dl + Dp
    f32 = jnp.float32

    x = x.astype(f32)
    policy = policy.astype(f32)
    dyn = dyn.astype(f32)

    # --- parameter packing: gates fused along lanes in (r|z|n) order ---------
    layer_inputs = []
    weight_elems = 0
    for l in range(L):
        Wih = params["w_ih"][l].astype(f32)                  # [3H, in_l]
        Whh = params["w_hh"][l].astype(f32)                  # [3H, H]
        bih = params["b_ih"][l].astype(f32).reshape(3, H)
        bhh = params["b_hh"][l].astype(f32).reshape(3, H)
        w_ih_cat = Wih.T                                     # [in_l, 3H]
        w_hh_cat = Whh.T                                     # [H, 3H]
        # Fold the r/z halves of b_hh into the precomputed input-side bias; the
        # n-gate b_hh stays separate (it is multiplied by r inside the loop).
        b_gi = jnp.concatenate([bih[0] + bhh[0],
                                bih[1] + bhh[1],
                                bih[2]]).reshape(1, 3 * H)
        b_hn = bhh[2].reshape(1, H)
        layer_inputs += [w_ih_cat, w_hh_cat, b_gi, b_hn]
        weight_elems += w_ih_cat.size + w_hh_cat.size + b_gi.size + b_hn.size

    # Fused mean/std head: one [H, 2*Dl] weight, one [1, 2*Dl] bias.
    w_head = jnp.concatenate([params["w_mean"].T, params["w_std"].T], axis=1).astype(f32)
    b_head = jnp.concatenate([params["b_mean"], params["b_std"]]).astype(f32).reshape(1, 2 * Dl)
    weight_elems += w_head.size + b_head.size

    # --- batch tiling ---------------------------------------------------------
    # Per-batch-row VMEM cost (bytes): scratch + double-buffered tiled I/O.
    row_bytes = 4 * (T * 4 * H                              # gi + seq scratch
                     + 2 * (T * Din + T * Dl + L * H)       # inputs (dbl-buffered)
                     + 2 * (T * 2 * Dl + L * H))            # outputs (dbl-buffered)
    budget = 20 * 2 ** 20
    bt = max(8, min(128, (budget // row_bytes) // 8 * 8))   # multiple of 8
    bt = min(bt, _round_up(B, 8))
    # v7x megacore: keep >= 2 grid steps when the batch is big enough to split.
    if _round_up(B, 8) >= 16 and _round_up(B, bt) // bt < 2:
        bt = _round_up(_round_up(B, 8) // 2, 8)
    Bp = _round_up(B, bt)                                    # padded batch
    grid = (Bp // bt,)

    pad_b = Bp - B
    inp = jnp.concatenate([x, policy], axis=-1)              # [T, B, Din]
    if pad_b:
        inp = jnp.pad(inp, ((0, 0), (0, pad_b), (0, 0)))
        x_in = jnp.pad(x, ((0, 0), (0, pad_b), (0, 0)))
        dyn_in = jnp.pad(dyn, ((0, 0), (0, pad_b), (0, 0)))
    else:
        x_in, dyn_in = x, dyn

    def batched3(d0, d2):
        return pl.BlockSpec((d0, bt, d2), lambda b: (0, b, 0))

    def full_spec(arr):
        zeros = (0,) * arr.ndim
        return pl.BlockSpec(arr.shape, lambda b, _z=zeros: _z)

    in_specs = ([batched3(T, Din), batched3(T, Dl), batched3(L, H)]
                + [full_spec(a) for a in layer_inputs]
                + [full_spec(w_head), full_spec(b_head)])
    out_specs = (pl.BlockSpec((T, bt, 2 * Dl), lambda b: (0, b, 0)),
                 pl.BlockSpec((L, bt, H), lambda b: (0, b, 0)))

    # Explicit VMEM limit: v5e scoped default is 16 MiB, v7x physical is 64 MiB.
    est_bytes = row_bytes * bt + 2 * 4 * weight_elems
    vmem_limit = int(min(max(2 * est_bytes, 32 * 2 ** 20), 48 * 2 ** 20))

    kernel = functools.partial(_gru_predictor_kernel,
                               T=T, bt=bt, H=H, Dl=Dl, Din=Din, num_layers=L)

    packed, hN = pl.pallas_call(
        kernel,
        out_shape=(jax.ShapeDtypeStruct((T, Bp, 2 * Dl), f32),
                   jax.ShapeDtypeStruct((L, Bp, H), f32)),
        grid_spec=pltpu.PrefetchScalarGridSpec(
            num_scalar_prefetch=0,
            grid=grid,
            in_specs=in_specs,
            out_specs=out_specs,
            scratch_shapes=[pltpu.VMEM((T * bt, 3 * H), f32),
                            pltpu.VMEM((T * bt, H), f32)]),
        compiler_params=pltpu.CompilerParams(
            dimension_semantics=("parallel",),
            vmem_limit_bytes=vmem_limit),
    )(inp, x_in, dyn_in, *layer_inputs, w_head, b_head)

    mean = packed[:, :B, :Dl]
    std = packed[:, :B, Dl:]
    return mean, std, hN[:, :B, :]


def reference_forward(x, policy, dyn, params):
    """Pure-JAX reference with identical (PyTorch nn.GRU eval) semantics."""
    T, B, Dl = x.shape
    L, _, H = dyn.shape
    seq = jnp.concatenate([x, policy], axis=-1)
    hN = []
    for l in range(L):
        Wih, Whh = params["w_ih"][l], params["w_hh"][l]
        bih, bhh = params["b_ih"][l], params["b_hh"][l]
        h = dyn[l]
        outs = []
        for t in range(T):
            gi = seq[t] @ Wih.T + bih
            gh = h @ Whh.T + bhh
            r = jax.nn.sigmoid(gi[:, :H] + gh[:, :H])
            z = jax.nn.sigmoid(gi[:, H:2 * H] + gh[:, H:2 * H])
            n = jnp.tanh(gi[:, 2 * H:] + r * gh[:, 2 * H:])
            h = (1.0 - z) * n + z * h
            outs.append(h)
        seq = jnp.stack(outs)
        hN.append(h)
    pred = seq
    mean = pred @ params["w_mean"].T + params["b_mean"] + x
    std = jax.nn.softplus(pred @ params["w_std"].T + params["b_std"]) + 1e-6
    return mean, std, jnp.stack(hN)


def init_params(key, latent_dim, policy_dim, dynamic_dim, num_rnn_layers):
    """Deterministic init matching the PyTorch module's parameter shapes."""
    H = dynamic_dim
    k = 1.0 / jnp.sqrt(jnp.float32(H))
    params = {"w_ih": [], "w_hh": [], "b_ih": [], "b_hh": []}
    for l in range(num_rnn_layers):
        in_l = (latent_dim + policy_dim) if l == 0 else H
        key, k1, k2, k3, k4 = jax.random.split(key, 5)
        params["w_ih"].append(jax.random.uniform(k1, (3 * H, in_l), jnp.float32, -k, k))
        params["w_hh"].append(jax.random.uniform(k2, (3 * H, H), jnp.float32, -k, k))
        params["b_ih"].append(jax.random.uniform(k3, (3 * H,), jnp.float32, -k, k))
        params["b_hh"].append(jax.random.uniform(k4, (3 * H,), jnp.float32, -k, k))
    key, k1, k2, k3, k4 = jax.random.split(key, 5)
    params["w_mean"] = jax.random.uniform(k1, (latent_dim, H), jnp.float32, -k, k)
    params["b_mean"] = jax.random.uniform(k2, (latent_dim,), jnp.float32, -k, k)
    params["w_std"] = jax.random.uniform(k3, (latent_dim, H), jnp.float32, -k, k)
    params["b_std"] = jax.random.uniform(k4, (latent_dim,), jnp.float32, -k, k)
    return params


if __name__ == "__main__":
    latent_dim, policy_dim, dynamic_dim, num_rnn_layers = 8, 4, 32, 2
    T, n_policies = 8, 2

    key = jax.random.PRNGKey(0)
    key, kx, kp, kd = jax.random.split(key, 4)
    x = jax.random.normal(kx, (T, n_policies, latent_dim), jnp.float32)
    policy = jax.random.normal(kp, (T, n_policies, policy_dim), jnp.float32)
    dyn = jax.random.normal(kd, (num_rnn_layers, n_policies, dynamic_dim), jnp.float32)

    params = init_params(key, latent_dim, policy_dim, dynamic_dim, num_rnn_layers)

    mean, std, dyn_out = predictor_gru_forward(x, policy, dyn, params)
    jax.block_until_ready((mean, std, dyn_out))

    mean_ref, std_ref, dyn_ref = reference_forward(x, policy, dyn, params)
    ok = (jnp.allclose(mean, mean_ref, rtol=1e-4, atol=1e-4)
          and jnp.allclose(std, std_ref, rtol=1e-4, atol=1e-4)
          and jnp.allclose(dyn_out, dyn_ref, rtol=1e-4, atol=1e-4))
    if not bool(ok):
        raise AssertionError("Pallas kernel output does not match reference")
    print("KERNEL_OK")
</pallas_src>

<mosaic_0001>
module attributes {stable_mosaic.version = 11 : i64} {
  func.func @_gru_predictor_kernel(%arg0: i32, %arg1: memref<8x8x12xf32, #tpu.memory_space<vmem>>, %arg2: memref<8x8x8xf32, #tpu.memory_space<vmem>>, %arg3: memref<2x8x32xf32, #tpu.memory_space<vmem>>, %arg4: memref<12x96xf32, #tpu.memory_space<vmem>>, %arg5: memref<32x96xf32, #tpu.memory_space<vmem>>, %arg6: memref<1x96xf32, #tpu.memory_space<vmem>>, %arg7: memref<1x32xf32, #tpu.memory_space<vmem>>, %arg8: memref<32x96xf32, #tpu.memory_space<vmem>>, %arg9: memref<32x96xf32, #tpu.memory_space<vmem>>, %arg10: memref<1x96xf32, #tpu.memory_space<vmem>>, %arg11: memref<1x32xf32, #tpu.memory_space<vmem>>, %arg12: memref<32x16xf32, #tpu.memory_space<vmem>>, %arg13: memref<1x16xf32, #tpu.memory_space<vmem>>, %arg14: memref<8x8x16xf32, #tpu.memory_space<vmem>>, %arg15: memref<2x8x32xf32, #tpu.memory_space<vmem>>, %arg16: memref<64x96xf32, #tpu.memory_space<vmem>>, %arg17: memref<64x32xf32, #tpu.memory_space<vmem>>) attributes {dimension_semantics = [#tpu.dimension_semantics<parallel>], iteration_bounds = array<i64: 1>, scalar_prefetch = 0 : i64, scratch_operands = 2 : i64, tpu.core_type = #tpu.core_type<tc>, window_params = [{transform_indices = @transform_0, window_bounds = array<i64: 8, 8, 12>}, {transform_indices = @transform_1, window_bounds = array<i64: 8, 8, 8>}, {transform_indices = @transform_2, window_bounds = array<i64: 2, 8, 32>}, {pipeline_mode = #tpu.pipeline_mode<synchronous>, transform_indices = @transform_3, window_bounds = array<i64: 12, 96>}, {pipeline_mode = #tpu.pipeline_mode<synchronous>, transform_indices = @transform_4, window_bounds = array<i64: 32, 96>}, {pipeline_mode = #tpu.pipeline_mode<synchronous>, transform_indices = @transform_5, window_bounds = array<i64: 1, 96>}, {pipeline_mode = #tpu.pipeline_mode<synchronous>, transform_indices = @transform_6, window_bounds = array<i64: 1, 32>}, {pipeline_mode = #tpu.pipeline_mode<synchronous>, transform_indices = @transform_7, window_bounds = array<i64: 32, 96>}, {pipeline_mode = #tpu.pipeline_mode<synchronous>, transform_indices = @transform_8, window_bounds = array<i64: 32, 96>}, {pipeline_mode = #tpu.pipeline_mode<synchronous>, transform_indices = @transform_9, window_bounds = array<i64: 1, 96>}, {pipeline_mode = #tpu.pipeline_mode<synchronous>, transform_indices = @transform_10, window_bounds = array<i64: 1, 32>}, {pipeline_mode = #tpu.pipeline_mode<synchronous>, transform_indices = @transform_11, window_bounds = array<i64: 32, 16>}, {pipeline_mode = #tpu.pipeline_mode<synchronous>, transform_indices = @transform_12, window_bounds = array<i64: 1, 16>}, {transform_indices = @transform_13, window_bounds = array<i64: 8, 8, 16>}, {transform_indices = @transform_14, window_bounds = array<i64: 2, 8, 32>}]} {
    %c0 = arith.constant 0 : index
    %c0_0 = arith.constant 0 : index
    %c0_1 = arith.constant 0 : index
    %0 = vector.load %arg1[%c0, %c0_0, %c0_1] : memref<8x8x12xf32, #tpu.memory_space<vmem>>, vector<8x8x12xf32>
    %1 = vector.shape_cast %0 : vector<8x8x12xf32> to vector<64x12xf32>
    %c0_2 = arith.constant 0 : index
    %c0_3 = arith.constant 0 : index
    %2 = vector.load %arg4[%c0_2, %c0_3] : memref<12x96xf32, #tpu.memory_space<vmem>>, vector<12x96xf32>
    %cst = arith.constant dense<0.000000e+00> : vector<64x96xf32>
    %3 = tpu.matmul %1, %2, %cst {dimension_numbers = #tpu.dot_dimension_numbers<[1], [0], [0], [1], [0, 0, 1, 1], [], []>} : vector<64x12xf32>, vector<12x96xf32>, vector<64x96xf32> -> vector<64x96xf32>
    %c0_4 = arith.constant 0 : index
    %c0_5 = arith.constant 0 : index
    %4 = vector.load %arg6[%c0_4, %c0_5] : memref<1x96xf32, #tpu.memory_space<vmem>>, vector<1x96xf32>
    %5 = vector.broadcast %4 : vector<1x96xf32> to vector<64x96xf32>
    %6 = arith.addf %3, %5 : vector<64x96xf32>
    %c0_6 = arith.constant 0 : index
    %c0_7 = arith.constant 0 : index
    %7 = vector.load %arg16[%c0_6, %c0_7] : memref<64x96xf32, #tpu.memory_space<vmem>>, vector<64x96xf32>
    tpu.vector_store %arg16[%c0_6, %c0_7], %6 {strides = array<i32>} : memref<64x96xf32, #tpu.memory_space<vmem>>, vector<64x96xf32>,
    %c0_8 = arith.constant 0 : index
    %c0_9 = arith.constant 0 : index
    %8 = vector.load %arg5[%c0_8, %c0_9] : memref<32x96xf32, #tpu.memory_space<vmem>>, vector<32x96xf32>
    %c0_10 = arith.constant 0 : index
    %c0_11 = arith.constant 0 : index
    %9 = vector.load %arg7[%c0_10, %c0_11] : memref<1x32xf32, #tpu.memory_space<vmem>>, vector<1x32xf32>
    %c0_12 = arith.constant 0 : index
    %c0_13 = arith.constant 0 : index
    %c0_14 = arith.constant 0 : index
    %10 = vector.load %arg3[%c0_12, %c0_13, %c0_14] : memref<2x8x32xf32, #tpu.memory_space<vmem>>, vector<1x8x32xf32>
    %11 = vector.shape_cast %10 : vector<1x8x32xf32> to vector<8x32xf32>
    %cst_15 = arith.constant dense<0.000000e+00> : vector<8x96xf32>
    %12 = tpu.matmul %11, %8, %cst_15 {dimension_numbers = #tpu.dot_dimension_numbers<[1], [0], [0], [1], [0, 0, 1, 1], [], []>} : vector<8x32xf32>, vector<32x96xf32>, vector<8x96xf32> -> vector<8x96xf32>
    %c0_16 = arith.constant 0 : index
    %c0_17 = arith.constant 0 : index
    %13 = vector.load %arg16[%c0_16, %c0_17] : memref<64x96xf32, #tpu.memory_space<vmem>>, vector<8x96xf32>
    %14 = arith.addf %13, %12 : vector<8x96xf32>
    %15 = vector.extract_strided_slice %14 {offsets = [0, 0], sizes = [8, 32], strides = [1, 1]} : vector<8x96xf32> to vector<8x32xf32>
    %16 = arith.negf %15 : vector<8x32xf32>
    %17 = math.exp %16 : vector<8x32xf32>
    %cst_18 = arith.constant 1.000000e+00 : f32
    %18 = vector.broadcast %cst_18 : f32 to vector<8x32xf32>
    %19 = arith.addf %18, %17 : vector<8x32xf32>
    %20 = arith.divf %18, %19 : vector<8x32xf32>
    %21 = vector.extract_strided_slice %14 {offsets = [0, 32], sizes = [8, 32], strides = [1, 1]} : vector<8x96xf32> to vector<8x32xf32>
    %22 = arith.negf %21 : vector<8x32xf32>
    %23 = math.exp %22 : vector<8x32xf32>
    %cst_19 = arith.constant 1.000000e+00 : f32
    %24 = vector.broadcast %cst_19 : f32 to vector<8x32xf32>
    %25 = arith.addf %24, %23 : vector<8x32xf32>
    %26 = arith.divf %24, %25 : vector<8x32xf32>
    %27 = vector.extract_strided_slice %13 {offsets = [0, 64], sizes = [8, 32], strides = [1, 1]} : vector<8x96xf32> to vector<8x32xf32>
    %28 = vector.extract_strided_slice %12 {offsets = [0, 64], sizes = [8, 32], strides = [1, 1]} : vector<8x96xf32> to vector<8x32xf32>
    %29 = vector.broadcast %9 : vector<1x32xf32> to vector<8x32xf32>
    %30 = arith.addf %28, %29 : vector<8x32xf32>
    %31 = arith.mulf %20, %30 : vector<8x32xf32>
    %32 = arith.addf %27, %31 : vector<8x32xf32>
    %33 = math.tanh %32 : vector<8x32xf32>
    %cst_20 = arith.constant 1.000000e+00 : f32
    %34 = vector.broadcast %cst_20 : f32 to vector<8x32xf32>
    %35 = arith.subf %34, %26 : vector<8x32xf32>
    %36 = arith.mulf %35, %33 : vector<8x32xf32>
    %37 = arith.mulf %26, %11 : vector<8x32xf32>
    %38 = arith.addf %36, %37 : vector<8x32xf32>
    %c0_21 = arith.constant 0 : index
    %c0_22 = arith.constant 0 : index
    %39 = vector.load %arg17[%c0_21, %c0_22] : memref<64x32xf32, #tpu.memory_space<vmem>>, vector<8x32xf32>
    tpu.vector_store %arg17[%c0_21, %c0_22], %38 {strides = array<i32>} : memref<64x32xf32, #tpu.memory_space<vmem>>, vector<8x32xf32>,
    %cst_23 = arith.constant dense<0.000000e+00> : vector<8x96xf32>
    %40 = tpu.matmul %38, %8, %cst_23 {dimension_numbers = #tpu.dot_dimension_numbers<[1], [0], [0], [1], [0, 0, 1, 1], [], []>} : vector<8x32xf32>, vector<32x96xf32>, vector<8x96xf32> -> vector<8x96xf32>
    %c8 = arith.constant 8 : index
    %c0_24 = arith.constant 0 : index
    %41 = vector.load %arg16[%c8, %c0_24] : memref<64x96xf32, #tpu.memory_space<vmem>>, vector<8x96xf32>
    %42 = arith.addf %41, %40 : vector<8x96xf32>
    %43 = vector.extract_strided_slice %42 {offsets = [0, 0], sizes = [8, 32], strides = [1, 1]} : vector<8x96xf32> to vector<8x32xf32>
    %44 = arith.negf %43 : vector<8x32xf32>
    %45 = math.exp %44 : vector<8x32xf32>
    %cst_25 = arith.constant 1.000000e+00 : f32
    %46 = vector.broadcast %cst_25 : f32 to vector<8x32xf32>
    %47 = arith.addf %46, %45 : vector<8x32xf32>
    %48 = arith.divf %46, %47 : vector<8x32xf32>
    %49 = vector.extract_strided_slice %42 {offsets = [0, 32], sizes = [8, 32], strides = [1, 1]} : vector<8x96xf32> to vector<8x32xf32>
    %50 = arith.negf %49 : vector<8x32xf32>
    %51 = math.exp %50 : vector<8x32xf32>
    %cst_26 = arith.constant 1.000000e+00 : f32
    %52 = vector.broadcast %cst_26 : f32 to vector<8x32xf32>
    %53 = arith.addf %52, %51 : vector<8x32xf32>
    %54 = arith.divf %52, %53 : vector<8x32xf32>
    %55 = vector.extract_strided_slice %41 {offsets = [0, 64], sizes = [8, 32], strides = [1, 1]} : vector<8x96xf32> to vector<8x32xf32>
    %56 = vector.extract_strided_slice %40 {offsets = [0, 64], sizes = [8, 32], strides = [1, 1]} : vector<8x96xf32> to vector<8x32xf32>
    %57 = vector.broadcast %9 : vector<1x32xf32> to vector<8x32xf32>
    %58 = arith.addf %56, %57 : vector<8x32xf32>
    %59 = arith.mulf %48, %58 : vector<8x32xf32>
    %60 = arith.addf %55, %59 : vector<8x32xf32>
    %61 = math.tanh %60 : vector<8x32xf32>
    %cst_27 = arith.constant 1.000000e+00 : f32
    %62 = vector.broadcast %cst_27 : f32 to vector<8x32xf32>
    %63 = arith.subf %62, %54 : vector<8x32xf32>
    %64 = arith.mulf %63, %61 : vector<8x32xf32>
    %65 = arith.mulf %54, %38 : vector<8x32xf32>
    %66 = arith.addf %64, %65 : vector<8x32xf32>
    %c8_28 = arith.constant 8 : index
    %c0_29 = arith.constant 0 : index
    %67 = vector.load %arg17[%c8_28, %c0_29] : memref<64x32xf32, #tpu.memory_space<vmem>>, vector<8x32xf32>
    tpu.vector_store %arg17[%c8_28, %c0_29], %66 {strides = array<i32>} : memref<64x32xf32, #tpu.memory_space<vmem>>, vector<8x32xf32>,
    %cst_30 = arith.constant dense<0.000000e+00> : vector<8x96xf32>
    %68 = tpu.matmul %66, %8, %cst_30 {dimension_numbers = #tpu.dot_dimension_numbers<[1], [0], [0], [1], [0, 0, 1, 1], [], []>} : vector<8x32xf32>, vector<32x96xf32>, vector<8x96xf32> -> vector<8x96xf32>
    %c16 = arith.constant 16 : index
    %c0_31 = arith.constant 0 : index
    %69 = vector.load %arg16[%c16, %c0_31] : memref<64x96xf32, #tpu.memory_space<vmem>>, vector<8x96xf32>
    %70 = arith.addf %69, %68 : vector<8x96xf32>
    %71 = vector.extract_strided_slice %70 {offsets = [0, 0], sizes = [8, 32], strides = [1, 1]} : vector<8x96xf32> to vector<8x32xf32>
    %72 = arith.negf %71 : vector<8x32xf32>
    %73 = math.exp %72 : vector<8x32xf32>
    %cst_32 = arith.constant 1.000000e+00 : f32
    %74 = vector.broadcast %cst_32 : f32 to vector<8x32xf32>
    %75 = arith.addf %74, %73 : vector<8x32xf32>
    %76 = arith.divf %74, %75 : vector<8x32xf32>
    %77 = vector.extract_strided_slice %70 {offsets = [0, 32], sizes = [8, 32], strides = [1, 1]} : vector<8x96xf32> to vector<8x32xf32>
    %78 = arith.negf %77 : vector<8x32xf32>
    %79 = math.exp %78 : vector<8x32xf32>
    %cst_33 = arith.constant 1.000000e+00 : f32
    %80 = vector.broadcast %cst_33 : f32 to vector<8x32xf32>
    %81 = arith.addf %80, %79 : vector<8x32xf32>
    %82 = arith.divf %80, %81 : vector<8x32xf32>
    %83 = vector.extract_strided_slice %69 {offsets = [0, 64], sizes = [8, 32], strides = [1, 1]} : vector<8x96xf32> to vector<8x32xf32>
    %84 = vector.extract_strided_slice %68 {offsets = [0, 64], sizes = [8, 32], strides = [1, 1]} : vector<8x96xf32> to vector<8x32xf32>
    %85 = vector.broadcast %9 : vector<1x32xf32> to vector<8x32xf32>
    %86 = arith.addf %84, %85 : vector<8x32xf32>
    %87 = arith.mulf %76, %86 : vector<8x32xf32>
    %88 = arith.addf %83, %87 : vector<8x32xf32>
    %89 = math.tanh %88 : vector<8x32xf32>
    %cst_34 = arith.constant 1.000000e+00 : f32
    %90 = vector.broadcast %cst_34 : f32 to vector<8x32xf32>
    %91 = arith.subf %90, %82 : vector<8x32xf32>
    %92 = arith.mulf %91, %89 : vector<8x32xf32>
    %93 = arith.mulf %82, %66 : vector<8x32xf32>
    %94 = arith.addf %92, %93 : vector<8x32xf32>
    %c16_35 = arith.constant 16 : index
    %c0_36 = arith.constant 0 : index
    %95 = vector.load %arg17[%c16_35, %c0_36] : memref<64x32xf32, #tpu.memory_space<vmem>>, vector<8x32xf32>
    tpu.vector_store %arg17[%c16_35, %c0_36], %94 {strides = array<i32>} : memref<64x32xf32, #tpu.memory_space<vmem>>, vector<8x32xf32>,
    %cst_37 = arith.constant dense<0.000000e+00> : vector<8x96xf32>
    %96 = tpu.matmul %94, %8, %cst_37 {dimension_numbers = #tpu.dot_dimension_numbers<[1], [0], [0], [1], [0, 0, 1, 1], [], []>} : vector<8x32xf32>, vector<32x96xf32>, vector<8x96xf32> -> vector<8x96xf32>
    %c24 = arith.constant 24 : index
    %c0_38 = arith.constant 0 : index
    %97 = vector.load %arg16[%c24, %c0_38] : memref<64x96xf32, #tpu.memory_space<vmem>>, vector<8x96xf32>
    %98 = arith.addf %97, %96 : vector<8x96xf32>
    %99 = vector.extract_strided_slice %98 {offsets = [0, 0], sizes = [8, 32], strides = [1, 1]} : vector<8x96xf32> to vector<8x32xf32>
    %100 = arith.negf %99 : vector<8x32xf32>
    %101 = math.exp %100 : vector<8x32xf32>
    %cst_39 = arith.constant 1.000000e+00 : f32
    %102 = vector.broadcast %cst_39 : f32 to vector<8x32xf32>
    %103 = arith.addf %102, %101 : vector<8x32xf32>
    %104 = arith.divf %102, %103 : vector<8x32xf32>
    %105 = vector.extract_strided_slice %98 {offsets = [0, 32], sizes = [8, 32], strides = [1, 1]} : vector<8x96xf32> to vector<8x32xf32>
    %106 = arith.negf %105 : vector<8x32xf32>
    %107 = math.exp %106 : vector<8x32xf32>
    %cst_40 = arith.constant 1.000000e+00 : f32
    %108 = vector.broadcast %cst_40 : f32 to vector<8x32xf32>
    %109 = arith.addf %108, %107 : vector<8x32xf32>
    %110 = arith.divf %108, %109 : vector<8x32xf32>
    %111 = vector.extract_strided_slice %97 {offsets = [0, 64], sizes = [8, 32], strides = [1, 1]} : vector<8x96xf32> to vector<8x32xf32>
    %112 = vector.extract_strided_slice %96 {offsets = [0, 64], sizes = [8, 32], strides = [1, 1]} : vector<8x96xf32> to vector<8x32xf32>
    %113 = vector.broadcast %9 : vector<1x32xf32> to vector<8x32xf32>
    %114 = arith.addf %112, %113 : vector<8x32xf32>
    %115 = arith.mulf %104, %114 : vector<8x32xf32>
    %116 = arith.addf %111, %115 : vector<8x32xf32>
    %117 = math.tanh %116 : vector<8x32xf32>
    %cst_41 = arith.constant 1.000000e+00 : f32
    %118 = vector.broadcast %cst_41 : f32 to vector<8x32xf32>
    %119 = arith.subf %118, %110 : vector<8x32xf32>
    %120 = arith.mulf %119, %117 : vector<8x32xf32>
    %121 = arith.mulf %110, %94 : vector<8x32xf32>
    %122 = arith.addf %120, %121 : vector<8x32xf32>
    %c24_42 = arith.constant 24 : index
    %c0_43 = arith.constant 0 : index
    %123 = vector.load %arg17[%c24_42, %c0_43] : memref<64x32xf32, #tpu.memory_space<vmem>>, vector<8x32xf32>
    tpu.vector_store %arg17[%c24_42, %c0_43], %122 {strides = array<i32>} : memref<64x32xf32, #tpu.memory_space<vmem>>, vector<8x32xf32>,
    %cst_44 = arith.constant dense<0.000000e+00> : vector<8x96xf32>
    %124 = tpu.matmul %122, %8, %cst_44 {dimension_numbers = #tpu.dot_dimension_numbers<[1], [0], [0], [1], [0, 0, 1, 1], [], []>} : vector<8x32xf32>, vector<32x96xf32>, vector<8x96xf32> -> vector<8x96xf32>
    %c32 = arith.constant 32 : index
    %c0_45 = arith.constant 0 : index
    %125 = vector.load %arg16[%c32, %c0_45] : memref<64x96xf32, #tpu.memory_space<vmem>>, vector<8x96xf32>
    %126 = arith.addf %125, %124 : vector<8x96xf32>
    %127 = vector.extract_strided_slice %126 {offsets = [0, 0], sizes = [8, 32], strides = [1, 1]} : vector<8x96xf32> to vector<8x32xf32>
    %128 = arith.negf %127 : vector<8x32xf32>
    %129 = math.exp %128 : vector<8x32xf32>
    %cst_46 = arith.constant 1.000000e+00 : f32
    %130 = vector.broadcast %cst_46 : f32 to vector<8x32xf32>
    %131 = arith.addf %130, %129 : vector<8x32xf32>
    %132 = arith.divf %130, %131 : vector<8x32xf32>
    %133 = vector.extract_strided_slice %126 {offsets = [0, 32], sizes = [8, 32], strides = [1, 1]} : vector<8x96xf32> to vector<8x32xf32>
    %134 = arith.negf %133 : vector<8x32xf32>
    %135 = math.exp %134 : vector<8x32xf32>
    %cst_47 = arith.constant 1.000000e+00 : f32
    %136 = vector.broadcast %cst_47 : f32 to vector<8x32xf32>
    %137 = arith.addf %136, %135 : vector<8x32xf32>
    %138 = arith.divf %136, %137 : vector<8x32xf32>
    %139 = vector.extract_strided_slice %125 {offsets = [0, 64], sizes = [8, 32], strides = [1, 1]} : vector<8x96xf32> to vector<8x32xf32>
    %140 = vector.extract_strided_slice %124 {offsets = [0, 64], sizes = [8, 32], strides = [1, 1]} : vector<8x96xf32> to vector<8x32xf32>
    %141 = vector.broadcast %9 : vector<1x32xf32> to vector<8x32xf32>
    %142 = arith.addf %140, %141 : vector<8x32xf32>
    %143 = arith.mulf %132, %142 : vector<8x32xf32>
    %144 = arith.addf %139, %143 : vector<8x32xf32>
    %145 = math.tanh %144 : vector<8x32xf32>
    %cst_48 = arith.constant 1.000000e+00 : f32
    %146 = vector.broadcast %cst_48 : f32 to vector<8x32xf32>
    %147 = arith.subf %146, %138 : vector<8x32xf32>
    %148 = arith.mulf %147, %145 : vector<8x32xf32>
    %149 = arith.mulf %138, %122 : vector<8x32xf32>
    %150 = arith.addf %148, %149 : vector<8x32xf32>
    %c32_49 = arith.constant 32 : index
    %c0_50 = arith.constant 0 : index
    %151 = vector.load %arg17[%c32_49, %c0_50] : memref<64x32xf32, #tpu.memory_space<vmem>>, vector<8x32xf32>
    tpu.vector_store %arg17[%c32_49, %c0_50], %150 {strides = array<i32>} : memref<64x32xf32, #tpu.memory_space<vmem>>, vector<8x32xf32>,
    %cst_51 = arith.constant dense<0.000000e+00> : vector<8x96xf32>
    %152 = tpu.matmul %150, %8, %cst_51 {dimension_numbers = #tpu.dot_dimension_numbers<[1], [0], [0], [1], [0, 0, 1, 1], [], []>} : vector<8x32xf32>, vector<32x96xf32>, vector<8x96xf32> -> vector<8x96xf32>
    %c40 = arith.constant 40 : index
    %c0_52 = arith.constant 0 : index
    %153 = vector.load %arg16[%c40, %c0_52] : memref<64x96xf32, #tpu.memory_space<vmem>>, vector<8x96xf32>
    %154 = arith.addf %153, %152 : vector<8x96xf32>
    %155 = vector.extract_strided_slice %154 {offsets = [0, 0], sizes = [8, 32], strides = [1, 1]} : vector<8x96xf32> to vector<8x32xf32>
    %156 = arith.negf %155 : vector<8x32xf32>
    %157 = math.exp %156 : vector<8x32xf32>
    %cst_53 = arith.constant 1.000000e+00 : f32
    %158 = vector.broadcast %cst_53 : f32 to vector<8x32xf32>
    %159 = arith.addf %158, %157 : vector<8x32xf32>
    %160 = arith.divf %158, %159 : vector<8x32xf32>
    %161 = vector.extract_strided_slice %154 {offsets = [0, 32], sizes = [8, 32], strides = [1, 1]} : vector<8x96xf32> to vector<8x32xf32>
    %162 = arith.negf %161 : vector<8x32xf32>
    %163 = math.exp %162 : vector<8x32xf32>
    %cst_54 = arith.constant 1.000000e+00 : f32
    %164 = vector.broadcast %cst_54 : f32 to vector<8x32xf32>
    %165 = arith.addf %164, %163 : vector<8x32xf32>
    %166 = arith.divf %164, %165 : vector<8x32xf32>
    %167 = vector.extract_strided_slice %153 {offsets = [0, 64], sizes = [8, 32], strides = [1, 1]} : vector<8x96xf32> to vector<8x32xf32>
    %168 = vector.extract_strided_slice %152 {offsets = [0, 64], sizes = [8, 32], strides = [1, 1]} : vector<8x96xf32> to vector<8x32xf32>
    %169 = vector.broadcast %9 : vector<1x32xf32> to vector<8x32xf32>
    %170 = arith.addf %168, %169 : vector<8x32xf32>
    %171 = arith.mulf %160, %170 : vector<8x32xf32>
    %172 = arith.addf %167, %171 : vector<8x32xf32>
    %173 = math.tanh %172 : vector<8x32xf32>
    %cst_55 = arith.constant 1.000000e+00 : f32
    %174 = vector.broadcast %cst_55 : f32 to vector<8x32xf32>
    %175 = arith.subf %174, %166 : vector<8x32xf32>
    %176 = arith.mulf %175, %173 : vector<8x32xf32>
    %177 = arith.mulf %166, %150 : vector<8x32xf32>
    %178 = arith.addf %176, %177 : vector<8x32xf32>
    %c40_56 = arith.constant 40 : index
    %c0_57 = arith.constant 0 : index
    %179 = vector.load %arg17[%c40_56, %c0_57] : memref<64x32xf32, #tpu.memory_space<vmem>>, vector<8x32xf32>
    tpu.vector_store %arg17[%c40_56, %c0_57], %178 {strides = array<i32>} : memref<64x32xf32, #tpu.memory_space<vmem>>, vector<8x32xf32>,
    %cst_58 = arith.constant dense<0.000000e+00> : vector<8x96xf32>
    %180 = tpu.matmul %178, %8, %cst_58 {dimension_numbers = #tpu.dot_dimension_numbers<[1], [0], [0], [1], [0, 0, 1, 1], [], []>} : vector<8x32xf32>, vector<32x96xf32>, vector<8x96xf32> -> vector<8x96xf32>
    %c48 = arith.constant 48 : index
    %c0_59 = arith.constant 0 : index
    %181 = vector.load %arg16[%c48, %c0_59] : memref<64x96xf32, #tpu.memory_space<vmem>>, vector<8x96xf32>
    %182 = arith.addf %181, %180 : vector<8x96xf32>
    %183 = vector.extract_strided_slice %182 {offsets = [0, 0], sizes = [8, 32], strides = [1, 1]} : vector<8x96xf32> to vector<8x32xf32>
    %184 = arith.negf %183 : vector<8x32xf32>
    %185 = math.exp %184 : vector<8x32xf32>
    %cst_60 = arith.constant 1.000000e+00 : f32
    %186 = vector.broadcast %cst_60 : f32 to vector<8x32xf32>
    %187 = arith.addf %186, %185 : vector<8x32xf32>
    %188 = arith.divf %186, %187 : vector<8x32xf32>
    %189 = vector.extract_strided_slice %182 {offsets = [0, 32], sizes = [8, 32], strides = [1, 1]} : vector<8x96xf32> to vector<8x32xf32>
    %190 = arith.negf %189 : vector<8x32xf32>
    %191 = math.exp %190 : vector<8x32xf32>
    %cst_61 = arith.constant 1.000000e+00 : f32
    %192 = vector.broadcast %cst_61 : f32 to vector<8x32xf32>
    %193 = arith.addf %192, %191 : vector<8x32xf32>
    %194 = arith.divf %192, %193 : vector<8x32xf32>
    %195 = vector.extract_strided_slice %181 {offsets = [0, 64], sizes = [8, 32], strides = [1, 1]} : vector<8x96xf32> to vector<8x32xf32>
    %196 = vector.extract_strided_slice %180 {offsets = [0, 64], sizes = [8, 32], strides = [1, 1]} : vector<8x96xf32> to vector<8x32xf32>
    %197 = vector.broadcast %9 : vector<1x32xf32> to vector<8x32xf32>
    %198 = arith.addf %196, %197 : vector<8x32xf32>
    %199 = arith.mulf %188, %198 : vector<8x32xf32>
    %200 = arith.addf %195, %199 : vector<8x32xf32>
    %201 = math.tanh %200 : vector<8x32xf32>
    %cst_62 = arith.constant 1.000000e+00 : f32
    %202 = vector.broadcast %cst_62 : f32 to vector<8x32xf32>
    %203 = arith.subf %202, %194 : vector<8x32xf32>
    %204 = arith.mulf %203, %201 : vector<8x32xf32>
    %205 = arith.mulf %194, %178 : vector<8x32xf32>
    %206 = arith.addf %204, %205 : vector<8x32xf32>
    %c48_63 = arith.constant 48 : index
    %c0_64 = arith.constant 0 : index
    %207 = vector.load %arg17[%c48_63, %c0_64] : memref<64x32xf32, #tpu.memory_space<vmem>>, vector<8x32xf32>
    tpu.vector_store %arg17[%c48_63, %c0_64], %206 {strides = array<i32>} : memref<64x32xf32, #tpu.memory_space<vmem>>, vector<8x32xf32>,
    %cst_65 = arith.constant dense<0.000000e+00> : vector<8x96xf32>
    %208 = tpu.matmul %206, %8, %cst_65 {dimension_numbers = #tpu.dot_dimension_numbers<[1], [0], [0], [1], [0, 0, 1, 1], [], []>} : vector<8x32xf32>, vector<32x96xf32>, vector<8x96xf32> -> vector<8x96xf32>
    %c56 = arith.constant 56 : index
    %c0_66 = arith.constant 0 : index
    %209 = vector.load %arg16[%c56, %c0_66] : memref<64x96xf32, #tpu.memory_space<vmem>>, vector<8x96xf32>
    %210 = arith.addf %209, %208 : vector<8x96xf32>
    %211 = vector.extract_strided_slice %210 {offsets = [0, 0], sizes = [8, 32], strides = [1, 1]} : vector<8x96xf32> to vector<8x32xf32>
    %212 = arith.negf %211 : vector<8x32xf32>
    %213 = math.exp %212 : vector<8x32xf32>
    %cst_67 = arith.constant 1.000000e+00 : f32
    %214 = vector.broadcast %cst_67 : f32 to vector<8x32xf32>
    %215 = arith.addf %214, %213 : vector<8x32xf32>
    %216 = arith.divf %214, %215 : vector<8x32xf32>
    %217 = vector.extract_strided_slice %210 {offsets = [0, 32], sizes = [8, 32], strides = [1, 1]} : vector<8x96xf32> to vector<8x32xf32>
    %218 = arith.negf %217 : vector<8x32xf32>
    %219 = math.exp %218 : vector<8x32xf32>
    %cst_68 = arith.constant 1.000000e+00 : f32
    %220 = vector.broadcast %cst_68 : f32 to vector<8x32xf32>
    %221 = arith.addf %220, %219 : vector<8x32xf32>
    %222 = arith.divf %220, %221 : vector<8x32xf32>
    %223 = vector.extract_strided_slice %209 {offsets = [0, 64], sizes = [8, 32], strides = [1, 1]} : vector<8x96xf32> to vector<8x32xf32>
    %224 = vector.extract_strided_slice %208 {offsets = [0, 64], sizes = [8, 32], strides = [1, 1]} : vector<8x96xf32> to vector<8x32xf32>
    %225 = vector.broadcast %9 : vector<1x32xf32> to vector<8x32xf32>
    %226 = arith.addf %224, %225 : vector<8x32xf32>
    %227 = arith.mulf %216, %226 : vector<8x32xf32>
    %228 = arith.addf %223, %227 : vector<8x32xf32>
    %229 = math.tanh %228 : vector<8x32xf32>
    %cst_69 = arith.constant 1.000000e+00 : f32
    %230 = vector.broadcast %cst_69 : f32 to vector<8x32xf32>
    %231 = arith.subf %230, %222 : vector<8x32xf32>
    %232 = arith.mulf %231, %229 : vector<8x32xf32>
    %233 = arith.mulf %222, %206 : vector<8x32xf32>
    %234 = arith.addf %232, %233 : vector<8x32xf32>
    %c56_70 = arith.constant 56 : index
    %c0_71 = arith.constant 0 : index
    %235 = vector.load %arg17[%c56_70, %c0_71] : memref<64x32xf32, #tpu.memory_space<vmem>>, vector<8x32xf32>
    tpu.vector_store %arg17[%c56_70, %c0_71], %234 {strides = array<i32>} : memref<64x32xf32, #tpu.memory_space<vmem>>, vector<8x32xf32>,
    %c0_72 = arith.constant 0 : index
    %c0_73 = arith.constant 0 : index
    %c0_74 = arith.constant 0 : index
    %236 = vector.load %arg15[%c0_72, %c0_73, %c0_74] : memref<2x8x32xf32, #tpu.memory_space<vmem>>, vector<1x8x32xf32>
    %237 = vector.shape_cast %236 : vector<1x8x32xf32> to vector<8x32xf32>
    %238 = vector.shape_cast %234 : vector<8x32xf32> to vector<1x8x32xf32>
    tpu.vector_store %arg15[%c0_72, %c0_73, %c0_74], %238 {strides = array<i32>} : memref<2x8x32xf32, #tpu.memory_space<vmem>>, vector<1x8x32xf32>,
    %c0_75 = arith.constant 0 : index
    %c0_76 = arith.constant 0 : index
    %239 = vector.load %arg17[%c0_75, %c0_76] : memref<64x32xf32, #tpu.memory_space<vmem>>, vector<64x32xf32>
    %c0_77 = arith.constant 0 : index
    %c0_78 = arith.constant 0 : index
    %240 = vector.load %arg8[%c0_77, %c0_78] : memref<32x96xf32, #tpu.memory_space<vmem>>, vector<32x96xf32>
    %cst_79 = arith.constant dense<0.000000e+00> : vector<64x96xf32>
    %241 = tpu.matmul %239, %240, %cst_79 {dimension_numbers = #tpu.dot_dimension_numbers<[1], [0], [0], [1], [0, 0, 1, 1], [], []>} : vector<64x32xf32>, vector<32x96xf32>, vector<64x96xf32> -> vector<64x96xf32>
    %c0_80 = arith.constant 0 : index
    %c0_81 = arith.constant 0 : index
    %242 = vector.load %arg10[%c0_80, %c0_81] : memref<1x96xf32, #tpu.memory_space<vmem>>, vector<1x96xf32>
    %243 = vector.broadcast %242 : vector<1x96xf32> to vector<64x96xf32>
    %244 = arith.addf %241, %243 : vector<64x96xf32>
    %c0_82 = arith.constant 0 : index
    %c0_83 = arith.constant 0 : index
    %245 = vector.load %arg16[%c0_82, %c0_83] : memref<64x96xf32, #tpu.memory_space<vmem>>, vector<64x96xf32>
    tpu.vector_store %arg16[%c0_82, %c0_83], %244 {strides = array<i32>} : memref<64x96xf32, #tpu.memory_space<vmem>>, vector<64x96xf32>,
    %c0_84 = arith.constant 0 : index
    %c0_85 = arith.constant 0 : index
    %246 = vector.load %arg9[%c0_84, %c0_85] : memref<32x96xf32, #tpu.memory_space<vmem>>, vector<32x96xf32>
    %c0_86 = arith.constant 0 : index
    %c0_87 = arith.constant 0 : index
    %247 = vector.load %arg11[%c0_86, %c0_87] : memref<1x32xf32, #tpu.memory_space<vmem>>, vector<1x32xf32>
    %c1 = arith.constant 1 : index
    %c0_88 = arith.constant 0 : index
    %c0_89 = arith.constant 0 : index
    %248 = vector.load %arg3[%c1, %c0_88, %c0_89] : memref<2x8x32xf32, #tpu.memory_space<vmem>>, vector<1x8x32xf32>
    %249 = vector.shape_cast %248 : vector<1x8x32xf32> to vector<8x32xf32>
    %cst_90 = arith.constant dense<0.000000e+00> : vector<8x96xf32>
    %250 = tpu.matmul %249, %246, %cst_90 {dimension_numbers = #tpu.dot_dimension_numbers<[1], [0], [0], [1], [0, 0, 1, 1], [], []>} : vector<8x32xf32>, vector<32x96xf32>, vector<8x96xf32> -> vector<8x96xf32>
    %c0_91 = arith.constant 0 : index
    %c0_92 = arith.constant 0 : index
    %251 = vector.load %arg16[%c0_91, %c0_92] : memref<64x96xf32, #tpu.memory_space<vmem>>, vector<8x96xf32>
    %252 = arith.addf %251, %250 : vector<8x96xf32>
    %253 = vector.extract_strided_slice %252 {offsets = [0, 0], sizes = [8, 32], strides = [1, 1]} : vector<8x96xf32> to vector<8x32xf32>
    %254 = arith.negf %253 : vector<8x32xf32>
    %255 = math.exp %254 : vector<8x32xf32>
    %cst_93 = arith.constant 1.000000e+00 : f32
    %256 = vector.broadcast %cst_93 : f32 to vector<8x32xf32>
    %257 = arith.addf %256, %255 : vector<8x32xf32>
    %258 = arith.divf %256, %257 : vector<8x32xf32>
    %259 = vector.extract_strided_slice %252 {offsets = [0, 32], sizes = [8, 32], strides = [1, 1]} : vector<8x96xf32> to vector<8x32xf32>
    %260 = arith.negf %259 : vector<8x32xf32>
    %261 = math.exp %260 : vector<8x32xf32>
    %cst_94 = arith.constant 1.000000e+00 : f32
    %262 = vector.broadcast %cst_94 : f32 to vector<8x32xf32>
    %263 = arith.addf %262, %261 : vector<8x32xf32>
    %264 = arith.divf %262, %263 : vector<8x32xf32>
    %265 = vector.extract_strided_slice %251 {offsets = [0, 64], sizes = [8, 32], strides = [1, 1]} : vector<8x96xf32> to vector<8x32xf32>
    %266 = vector.extract_strided_slice %250 {offsets = [0, 64], sizes = [8, 32], strides = [1, 1]} : vector<8x96xf32> to vector<8x32xf32>
    %267 = vector.broadcast %247 : vector<1x32xf32> to vector<8x32xf32>
    %268 = arith.addf %266, %267 : vector<8x32xf32>
    %269 = arith.mulf %258, %268 : vector<8x32xf32>
    %270 = arith.addf %265, %269 : vector<8x32xf32>
    %271 = math.tanh %270 : vector<8x32xf32>
    %cst_95 = arith.constant 1.000000e+00 : f32
    %272 = vector.broadcast %cst_95 : f32 to vector<8x32xf32>
    %273 = arith.subf %272, %264 : vector<8x32xf32>
    %274 = arith.mulf %273, %271 : vector<8x32xf32>
    %275 = arith.mulf %264, %249 : vector<8x32xf32>
    %276 = arith.addf %274, %275 : vector<8x32xf32>
    %c0_96 = arith.constant 0 : index
    %c0_97 = arith.constant 0 : index
    %277 = vector.load %arg17[%c0_96, %c0_97] : memref<64x32xf32, #tpu.memory_space<vmem>>, vector<8x32xf32>
    tpu.vector_store %arg17[%c0_96, %c0_97], %276 {strides = array<i32>} : memref<64x32xf32, #tpu.memory_space<vmem>>, vector<8x32xf32>,
    %cst_98 = arith.constant dense<0.000000e+00> : vector<8x96xf32>
    %278 = tpu.matmul %276, %246, %cst_98 {dimension_numbers = #tpu.dot_dimension_numbers<[1], [0], [0], [1], [0, 0, 1, 1], [], []>} : vector<8x32xf32>, vector<32x96xf32>, vector<8x96xf32> -> vector<8x96xf32>
    %c8_99 = arith.constant 8 : index
    %c0_100 = arith.constant 0 : index
    %279 = vector.load %arg16[%c8_99, %c0_100] : memref<64x96xf32, #tpu.memory_space<vmem>>, vector<8x96xf32>
    %280 = arith.addf %279, %278 : vector<8x96xf32>
    %281 = vector.extract_strided_slice %280 {offsets = [0, 0], sizes = [8, 32], strides = [1, 1]} : vector<8x96xf32> to vector<8x32xf32>
    %282 = arith.negf %281 : vector<8x32xf32>
    %283 = math.exp %282 : vector<8x32xf32>
    %cst_101 = arith.constant 1.000000e+00 : f32
    %284 = vector.broadcast %cst_101 : f32 to vector<8x32xf32>
    %285 = arith.addf %284, %283 : vector<8x32xf32>
    %286 = arith.divf %284, %285 : vector<8x32xf32>
    %287 = vector.extract_strided_slice %280 {offsets = [0, 32], sizes = [8, 32], strides = [1, 1]} : vector<8x96xf32> to vector<8x32xf32>
    %288 = arith.negf %287 : vector<8x32xf32>
    %289 = math.exp %288 : vector<8x32xf32>
    %cst_102 = arith.constant 1.000000e+00 : f32
    %290 = vector.broadcast %cst_102 : f32 to vector<8x32xf32>
    %291 = arith.addf %290, %289 : vector<8x32xf32>
    %292 = arith.divf %290, %291 : vector<8x32xf32>
    %293 = vector.extract_strided_slice %279 {offsets = [0, 64], sizes = [8, 32], strides = [1, 1]} : vector<8x96xf32> to vector<8x32xf32>
    %294 = vector.extract_strided_slice %278 {offsets = [0, 64], sizes = [8, 32], strides = [1, 1]} : vector<8x96xf32> to vector<8x32xf32>
    %295 = vector.broadcast %247 : vector<1x32xf32> to vector<8x32xf32>
    %296 = arith.addf %294, %295 : vector<8x32xf32>
    %297 = arith.mulf %286, %296 : vector<8x32xf32>
    %298 = arith.addf %293, %297 : vector<8x32xf32>
    %299 = math.tanh %298 : vector<8x32xf32>
    %cst_103 = arith.constant 1.000000e+00 : f32
    %300 = vector.broadcast %cst_103 : f32 to vector<8x32xf32>
    %301 = arith.subf %300, %292 : vector<8x32xf32>
    %302 = arith.mulf %301, %299 : vector<8x32xf32>
    %303 = arith.mulf %292, %276 : vector<8x32xf32>
    %304 = arith.addf %302, %303 : vector<8x32xf32>
    %c8_104 = arith.constant 8 : index
    %c0_105 = arith.constant 0 : index
    %305 = vector.load %arg17[%c8_104, %c0_105] : memref<64x32xf32, #tpu.memory_space<vmem>>, vector<8x32xf32>
    tpu.vector_store %arg17[%c8_104, %c0_105], %304 {strides = array<i32>} : memref<64x32xf32, #tpu.memory_space<vmem>>, vector<8x32xf32>,
    %cst_106 = arith.constant dense<0.000000e+00> : vector<8x96xf32>
    %306 = tpu.matmul %304, %246, %cst_106 {dimension_numbers = #tpu.dot_dimension_numbers<[1], [0], [0], [1], [0, 0, 1, 1], [], []>} : vector<8x32xf32>, vector<32x96xf32>, vector<8x96xf32> -> vector<8x96xf32>
    %c16_107 = arith.constant 16 : index
    %c0_108 = arith.constant 0 : index
    %307 = vector.load %arg16[%c16_107, %c0_108] : memref<64x96xf32, #tpu.memory_space<vmem>>, vector<8x96xf32>
    %308 = arith.addf %307, %306 : vector<8x96xf32>
    %309 = vector.extract_strided_slice %308 {offsets = [0, 0], sizes = [8, 32], strides = [1, 1]} : vector<8x96xf32> to vector<8x32xf32>
    %310 = arith.negf %309 : vector<8x32xf32>
    %311 = math.exp %310 : vector<8x32xf32>
    %cst_109 = arith.constant 1.000000e+00 : f32
    %312 = vector.broadcast %cst_109 : f32 to vector<8x32xf32>
    %313 = arith.addf %312, %311 : vector<8x32xf32>
    %314 = arith.divf %312, %313 : vector<8x32xf32>
    %315 = vector.extract_strided_slice %308 {offsets = [0, 32], sizes = [8, 32], strides = [1, 1]} : vector<8x96xf32> to vector<8x32xf32>
    %316 = arith.negf %315 : vector<8x32xf32>
    %317 = math.exp %316 : vector<8x32xf32>
    %cst_110 = arith.constant 1.000000e+00 : f32
    %318 = vector.broadcast %cst_110 : f32 to vector<8x32xf32>
    %319 = arith.addf %318, %317 : vector<8x32xf32>
    %320 = arith.divf %318, %319 : vector<8x32xf32>
    %321 = vector.extract_strided_slice %307 {offsets = [0, 64], sizes = [8, 32], strides = [1, 1]} : vector<8x96xf32> to vector<8x32xf32>
    %322 = vector.extract_strided_slice %306 {offsets = [0, 64], sizes = [8, 32], strides = [1, 1]} : vector<8x96xf32> to vector<8x32xf32>
    %323 = vector.broadcast %247 : vector<1x32xf32> to vector<8x32xf32>
    %324 = arith.addf %322, %323 : vector<8x32xf32>
    %325 = arith.mulf %314, %324 : vector<8x32xf32>
    %326 = arith.addf %321, %325 : vector<8x32xf32>
    %327 = math.tanh %326 : vector<8x32xf32>
    %cst_111 = arith.constant 1.000000e+00 : f32
    %328 = vector.broadcast %cst_111 : f32 to vector<8x32xf32>
    %329 = arith.subf %328, %320 : vector<8x32xf32>
    %330 = arith.mulf %329, %327 : vector<8x32xf32>
    %331 = arith.mulf %320, %304 : vector<8x32xf32>
    %332 = arith.addf %330, %331 : vector<8x32xf32>
    %c16_112 = arith.constant 16 : index
    %c0_113 = arith.constant 0 : index
    %333 = vector.load %arg17[%c16_112, %c0_113] : memref<64x32xf32, #tpu.memory_space<vmem>>, vector<8x32xf32>
    tpu.vector_store %arg17[%c16_112, %c0_113], %332 {strides = array<i32>} : memref<64x32xf32, #tpu.memory_space<vmem>>, vector<8x32xf32>,
    %cst_114 = arith.constant dense<0.000000e+00> : vector<8x96xf32>
    %334 = tpu.matmul %332, %246, %cst_114 {dimension_numbers = #tpu.dot_dimension_numbers<[1], [0], [0], [1], [0, 0, 1, 1], [], []>} : vector<8x32xf32>, vector<32x96xf32>, vector<8x96xf32> -> vector<8x96xf32>
    %c24_115 = arith.constant 24 : index
    %c0_116 = arith.constant 0 : index
    %335 = vector.load %arg16[%c24_115, %c0_116] : memref<64x96xf32, #tpu.memory_space<vmem>>, vector<8x96xf32>
    %336 = arith.addf %335, %334 : vector<8x96xf32>
    %337 = vector.extract_strided_slice %336 {offsets = [0, 0], sizes = [8, 32], strides = [1, 1]} : vector<8x96xf32> to vector<8x32xf32>
    %338 = arith.negf %337 : vector<8x32xf32>
    %339 = math.exp %338 : vector<8x32xf32>
    %cst_117 = arith.constant 1.000000e+00 : f32
    %340 = vector.broadcast %cst_117 : f32 to vector<8x32xf32>
    %341 = arith.addf %340, %339 : vector<8x32xf32>
    %342 = arith.divf %340, %341 : vector<8x32xf32>
    %343 = vector.extract_strided_slice %336 {offsets = [0, 32], sizes = [8, 32], strides = [1, 1]} : vector<8x96xf32> to vector<8x32xf32>
    %344 = arith.negf %343 : vector<8x32xf32>
    %345 = math.exp %344 : vector<8x32xf32>
    %cst_118 = arith.constant 1.000000e+00 : f32
    %346 = vector.broadcast %cst_118 : f32 to vector<8x32xf32>
    %347 = arith.addf %346, %345 : vector<8x32xf32>
    %348 = arith.divf %346, %347 : vector<8x32xf32>
    %349 = vector.extract_strided_slice %335 {offsets = [0, 64], sizes = [8, 32], strides = [1, 1]} : vector<8x96xf32> to vector<8x32xf32>
    %350 = vector.extract_strided_slice %334 {offsets = [0, 64], sizes = [8, 32], strides = [1, 1]} : vector<8x96xf32> to vector<8x32xf32>
    %351 = vector.broadcast %247 : vector<1x32xf32> to vector<8x32xf32>
    %352 = arith.addf %350, %351 : vector<8x32xf32>
    %353 = arith.mulf %342, %352 : vector<8x32xf32>
    %354 = arith.addf %349, %353 : vector<8x32xf32>
    %355 = math.tanh %354 : vector<8x32xf32>
    %cst_119 = arith.constant 1.000000e+00 : f32
    %356 = vector.broadcast %cst_119 : f32 to vector<8x32xf32>
    %357 = arith.subf %356, %348 : vector<8x32xf32>
    %358 = arith.mulf %357, %355 : vector<8x32xf32>
    %359 = arith.mulf %348, %332 : vector<8x32xf32>
    %360 = arith.addf %358, %359 : vector<8x32xf32>
    %c24_120 = arith.constant 24 : index
    %c0_121 = arith.constant 0 : index
    %361 = vector.load %arg17[%c24_120, %c0_121] : memref<64x32xf32, #tpu.memory_space<vmem>>, vector<8x32xf32>
    tpu.vector_store %arg17[%c24_120, %c0_121], %360 {strides = array<i32>} : memref<64x32xf32, #tpu.memory_space<vmem>>, vector<8x32xf32>,
    %cst_122 = arith.constant dense<0.000000e+00> : vector<8x96xf32>
    %362 = tpu.matmul %360, %246, %cst_122 {dimension_numbers = #tpu.dot_dimension_numbers<[1], [0], [0], [1], [0, 0, 1, 1], [], []>} : vector<8x32xf32>, vector<32x96xf32>, vector<8x96xf32> -> vector<8x96xf32>
    %c32_123 = arith.constant 32 : index
    %c0_124 = arith.constant 0 : index
    %363 = vector.load %arg16[%c32_123, %c0_124] : memref<64x96xf32, #tpu.memory_space<vmem>>, vector<8x96xf32>
    %364 = arith.addf %363, %362 : vector<8x96xf32>
    %365 = vector.extract_strided_slice %364 {offsets = [0, 0], sizes = [8, 32], strides = [1, 1]} : vector<8x96xf32> to vector<8x32xf32>
    %366 = arith.negf %365 : vector<8x32xf32>
    %367 = math.exp %366 : vector<8x32xf32>
    %cst_125 = arith.constant 1.000000e+00 : f32
    %368 = vector.broadcast %cst_125 : f32 to vector<8x32xf32>
    %369 = arith.addf %368, %367 : vector<8x32xf32>
    %370 = arith.divf %368, %369 : vector<8x32xf32>
    %371 = vector.extract_strided_slice %364 {offsets = [0, 32], sizes = [8, 32], strides = [1, 1]} : vector<8x96xf32> to vector<8x32xf32>
    %372 = arith.negf %371 : vector<8x32xf32>
    %373 = math.exp %372 : vector<8x32xf32>
    %cst_126 = arith.constant 1.000000e+00 : f32
    %374 = vector.broadcast %cst_126 : f32 to vector<8x32xf32>
    %375 = arith.addf %374, %373 : vector<8x32xf32>
    %376 = arith.divf %374, %375 : vector<8x32xf32>
    %377 = vector.extract_strided_slice %363 {offsets = [0, 64], sizes = [8, 32], strides = [1, 1]} : vector<8x96xf32> to vector<8x32xf32>
    %378 = vector.extract_strided_slice %362 {offsets = [0, 64], sizes = [8, 32], strides = [1, 1]} : vector<8x96xf32> to vector<8x32xf32>
    %379 = vector.broadcast %247 : vector<1x32xf32> to vector<8x32xf32>
    %380 = arith.addf %378, %379 : vector<8x32xf32>
    %381 = arith.mulf %370, %380 : vector<8x32xf32>
    %382 = arith.addf %377, %381 : vector<8x32xf32>
    %383 = math.tanh %382 : vector<8x32xf32>
    %cst_127 = arith.constant 1.000000e+00 : f32
    %384 = vector.broadcast %cst_127 : f32 to vector<8x32xf32>
    %385 = arith.subf %384, %376 : vector<8x32xf32>
    %386 = arith.mulf %385, %383 : vector<8x32xf32>
    %387 = arith.mulf %376, %360 : vector<8x32xf32>
    %388 = arith.addf %386, %387 : vector<8x32xf32>
    %c32_128 = arith.constant 32 : index
    %c0_129 = arith.constant 0 : index
    %389 = vector.load %arg17[%c32_128, %c0_129] : memref<64x32xf32, #tpu.memory_space<vmem>>, vector<8x32xf32>
    tpu.vector_store %arg17[%c32_128, %c0_129], %388 {strides = array<i32>} : memref<64x32xf32, #tpu.memory_space<vmem>>, vector<8x32xf32>,
    %cst_130 = arith.constant dense<0.000000e+00> : vector<8x96xf32>
    %390 = tpu.matmul %388, %246, %cst_130 {dimension_numbers = #tpu.dot_dimension_numbers<[1], [0], [0], [1], [0, 0, 1, 1], [], []>} : vector<8x32xf32>, vector<32x96xf32>, vector<8x96xf32> -> vector<8x96xf32>
    %c40_131 = arith.constant 40 : index
    %c0_132 = arith.constant 0 : index
    %391 = vector.load %arg16[%c40_131, %c0_132] : memref<64x96xf32, #tpu.memory_space<vmem>>, vector<8x96xf32>
    %392 = arith.addf %391, %390 : vector<8x96xf32>
    %393 = vector.extract_strided_slice %392 {offsets = [0, 0], sizes = [8, 32], strides = [1, 1]} : vector<8x96xf32> to vector<8x32xf32>
    %394 = arith.negf %393 : vector<8x32xf32>
    %395 = math.exp %394 : vector<8x32xf32>
    %cst_133 = arith.constant 1.000000e+00 : f32
    %396 = vector.broadcast %cst_133 : f32 to vector<8x32xf32>
    %397 = arith.addf %396, %395 : vector<8x32xf32>
    %398 = arith.divf %396, %397 : vector<8x32xf32>
    %399 = vector.extract_strided_slice %392 {offsets = [0, 32], sizes = [8, 32], strides = [1, 1]} : vector<8x96xf32> to vector<8x32xf32>
    %400 = arith.negf %399 : vector<8x32xf32>
    %401 = math.exp %400 : vector<8x32xf32>
    %cst_134 = arith.constant 1.000000e+00 : f32
    %402 = vector.broadcast %cst_134 : f32 to vector<8x32xf32>
    %403 = arith.addf %402, %401 : vector<8x32xf32>
    %404 = arith.divf %402, %403 : vector<8x32xf32>
    %405 = vector.extract_strided_slice %391 {offsets = [0, 64], sizes = [8, 32], strides = [1, 1]} : vector<8x96xf32> to vector<8x32xf32>
    %406 = vector.extract_strided_slice %390 {offsets = [0, 64], sizes = [8, 32], strides = [1, 1]} : vector<8x96xf32> to vector<8x32xf32>
    %407 = vector.broadcast %247 : vector<1x32xf32> to vector<8x32xf32>
    %408 = arith.addf %406, %407 : vector<8x32xf32>
    %409 = arith.mulf %398, %408 : vector<8x32xf32>
    %410 = arith.addf %405, %409 : vector<8x32xf32>
    %411 = math.tanh %410 : vector<8x32xf32>
    %cst_135 = arith.constant 1.000000e+00 : f32
    %412 = vector.broadcast %cst_135 : f32 to vector<8x32xf32>
    %413 = arith.subf %412, %404 : vector<8x32xf32>
    %414 = arith.mulf %413, %411 : vector<8x32xf32>
    %415 = arith.mulf %404, %388 : vector<8x32xf32>
    %416 = arith.addf %414, %415 : vector<8x32xf32>
    %c40_136 = arith.constant 40 : index
    %c0_137 = arith.constant 0 : index
    %417 = vector.load %arg17[%c40_136, %c0_137] : memref<64x32xf32, #tpu.memory_space<vmem>>, vector<8x32xf32>
    tpu.vector_store %arg17[%c40_136, %c0_137], %416 {strides = array<i32>} : memref<64x32xf32, #tpu.memory_space<vmem>>, vector<8x32xf32>,
    %cst_138 = arith.constant dense<0.000000e+00> : vector<8x96xf32>
    %418 = tpu.matmul %416, %246, %cst_138 {dimension_numbers = #tpu.dot_dimension_numbers<[1], [0], [0], [1], [0, 0, 1, 1], [], []>} : vector<8x32xf32>, vector<32x96xf32>, vector<8x96xf32> -> vector<8x96xf32>
    %c48_139 = arith.constant 48 : index
    %c0_140 = arith.constant 0 : index
    %419 = vector.load %arg16[%c48_139, %c0_140] : memref<64x96xf32, #tpu.memory_space<vmem>>, vector<8x96xf32>
    %420 = arith.addf %419, %418 : vector<8x96xf32>
    %421 = vector.extract_strided_slice %420 {offsets = [0, 0], sizes = [8, 32], strides = [1, 1]} : vector<8x96xf32> to vector<8x32xf32>
    %422 = arith.negf %421 : vector<8x32xf32>
    %423 = math.exp %422 : vector<8x32xf32>
    %cst_141 = arith.constant 1.000000e+00 : f32
    %424 = vector.broadcast %cst_141 : f32 to vector<8x32xf32>
    %425 = arith.addf %424, %423 : vector<8x32xf32>
    %426 = arith.divf %424, %425 : vector<8x32xf32>
    %427 = vector.extract_strided_slice %420 {offsets = [0, 32], sizes = [8, 32], strides = [1, 1]} : vector<8x96xf32> to vector<8x32xf32>
    %428 = arith.negf %427 : vector<8x32xf32>
    %429 = math.exp %428 : vector<8x32xf32>
    %cst_142 = arith.constant 1.000000e+00 : f32
    %430 = vector.broadcast %cst_142 : f32 to vector<8x32xf32>
    %431 = arith.addf %430, %429 : vector<8x32xf32>
    %432 = arith.divf %430, %431 : vector<8x32xf32>
    %433 = vector.extract_strided_slice %419 {offsets = [0, 64], sizes = [8, 32], strides = [1, 1]} : vector<8x96xf32> to vector<8x32xf32>
    %434 = vector.extract_strided_slice %418 {offsets = [0, 64], sizes = [8, 32], strides = [1, 1]} : vector<8x96xf32> to vector<8x32xf32>
    %435 = vector.broadcast %247 : vector<1x32xf32> to vector<8x32xf32>
    %436 = arith.addf %434, %435 : vector<8x32xf32>
    %437 = arith.mulf %426, %436 : vector<8x32xf32>
    %438 = arith.addf %433, %437 : vector<8x32xf32>
    %439 = math.tanh %438 : vector<8x32xf32>
    %cst_143 = arith.constant 1.000000e+00 : f32
    %440 = vector.broadcast %cst_143 : f32 to vector<8x32xf32>
    %441 = arith.subf %440, %432 : vector<8x32xf32>
    %442 = arith.mulf %441, %439 : vector<8x32xf32>
    %443 = arith.mulf %432, %416 : vector<8x32xf32>
    %444 = arith.addf %442, %443 : vector<8x32xf32>
    %c48_144 = arith.constant 48 : index
    %c0_145 = arith.constant 0 : index
    %445 = vector.load %arg17[%c48_144, %c0_145] : memref<64x32xf32, #tpu.memory_space<vmem>>, vector<8x32xf32>
    tpu.vector_store %arg17[%c48_144, %c0_145], %444 {strides = array<i32>} : memref<64x32xf32, #tpu.memory_space<vmem>>, vector<8x32xf32>,
    %cst_146 = arith.constant dense<0.000000e+00> : vector<8x96xf32>
    %446 = tpu.matmul %444, %246, %cst_146 {dimension_numbers = #tpu.dot_dimension_numbers<[1], [0], [0], [1], [0, 0, 1, 1], [], []>} : vector<8x32xf32>, vector<32x96xf32>, vector<8x96xf32> -> vector<8x96xf32>
    %c56_147 = arith.constant 56 : index
    %c0_148 = arith.constant 0 : index
    %447 = vector.load %arg16[%c56_147, %c0_148] : memref<64x96xf32, #tpu.memory_space<vmem>>, vector<8x96xf32>
    %448 = arith.addf %447, %446 : vector<8x96xf32>
    %449 = vector.extract_strided_slice %448 {offsets = [0, 0], sizes = [8, 32], strides = [1, 1]} : vector<8x96xf32> to vector<8x32xf32>
    %450 = arith.negf %449 : vector<8x32xf32>
    %451 = math.exp %450 : vector<8x32xf32>
    %cst_149 = arith.constant 1.000000e+00 : f32
    %452 = vector.broadcast %cst_149 : f32 to vector<8x32xf32>
    %453 = arith.addf %452, %451 : vector<8x32xf32>
    %454 = arith.divf %452, %453 : vector<8x32xf32>
    %455 = vector.extract_strided_slice %448 {offsets = [0, 32], sizes = [8, 32], strides = [1, 1]} : vector<8x96xf32> to vector<8x32xf32>
    %456 = arith.negf %455 : vector<8x32xf32>
    %457 = math.exp %456 : vector<8x32xf32>
    %cst_150 = arith.constant 1.000000e+00 : f32
    %458 = vector.broadcast %cst_150 : f32 to vector<8x32xf32>
    %459 = arith.addf %458, %457 : vector<8x32xf32>
    %460 = arith.divf %458, %459 : vector<8x32xf32>
    %461 = vector.extract_strided_slice %447 {offsets = [0, 64], sizes = [8, 32], strides = [1, 1]} : vector<8x96xf32> to vector<8x32xf32>
    %462 = vector.extract_strided_slice %446 {offsets = [0, 64], sizes = [8, 32], strides = [1, 1]} : vector<8x96xf32> to vector<8x32xf32>
    %463 = vector.broadcast %247 : vector<1x32xf32> to vector<8x32xf32>
    %464 = arith.addf %462, %463 : vector<8x32xf32>
    %465 = arith.mulf %454, %464 : vector<8x32xf32>
    %466 = arith.addf %461, %465 : vector<8x32xf32>
    %467 = math.tanh %466 : vector<8x32xf32>
    %cst_151 = arith.constant 1.000000e+00 : f32
    %468 = vector.broadcast %cst_151 : f32 to vector<8x32xf32>
    %469 = arith.subf %468, %460 : vector<8x32xf32>
    %470 = arith.mulf %469, %467 : vector<8x32xf32>
    %471 = arith.mulf %460, %444 : vector<8x32xf32>
    %472 = arith.addf %470, %471 : vector<8x32xf32>
    %c56_152 = arith.constant 56 : index
    %c0_153 = arith.constant 0 : index
    %473 = vector.load %arg17[%c56_152, %c0_153] : memref<64x32xf32, #tpu.memory_space<vmem>>, vector<8x32xf32>
    tpu.vector_store %arg17[%c56_152, %c0_153], %472 {strides = array<i32>} : memref<64x32xf32, #tpu.memory_space<vmem>>, vector<8x32xf32>,
    %c1_154 = arith.constant 1 : index
    %c0_155 = arith.constant 0 : index
    %c0_156 = arith.constant 0 : index
    %474 = vector.load %arg15[%c1_154, %c0_155, %c0_156] : memref<2x8x32xf32, #tpu.memory_space<vmem>>, vector<1x8x32xf32>
    %475 = vector.shape_cast %474 : vector<1x8x32xf32> to vector<8x32xf32>
    %476 = vector.shape_cast %472 : vector<8x32xf32> to vector<1x8x32xf32>
    tpu.vector_store %arg15[%c1_154, %c0_155, %c0_156], %476 {strides = array<i32>} : memref<2x8x32xf32, #tpu.memory_space<vmem>>, vector<1x8x32xf32>,
    %c0_157 = arith.constant 0 : index
    %c0_158 = arith.constant 0 : index
    %477 = vector.load %arg17[%c0_157, %c0_158] : memref<64x32xf32, #tpu.memory_space<vmem>>, vector<64x32xf32>
    %c0_159 = arith.constant 0 : index
    %c0_160 = arith.constant 0 : index
    %478 = vector.load %arg12[%c0_159, %c0_160] : memref<32x16xf32, #tpu.memory_space<vmem>>, vector<32x16xf32>
    %cst_161 = arith.constant dense<0.000000e+00> : vector<64x16xf32>
    %479 = tpu.matmul %477, %478, %cst_161 {dimension_numbers = #tpu.dot_dimension_numbers<[1], [0], [0], [1], [0, 0, 1, 1], [], []>} : vector<64x32xf32>, vector<32x16xf32>, vector<64x16xf32> -> vector<64x16xf32>
    %c0_162 = arith.constant 0 : index
    %c0_163 = arith.constant 0 : index
    %480 = vector.load %arg13[%c0_162, %c0_163] : memref<1x16xf32, #tpu.memory_space<vmem>>, vector<1x16xf32>
    %481 = vector.broadcast %480 : vector<1x16xf32> to vector<64x16xf32>
    %482 = arith.addf %479, %481 : vector<64x16xf32>
    %483 = vector.extract_strided_slice %482 {offsets = [0, 0], sizes = [64, 8], strides = [1, 1]} : vector<64x16xf32> to vector<64x8xf32>
    %c0_164 = arith.constant 0 : index
    %c0_165 = arith.constant 0 : index
    %c0_166 = arith.constant 0 : index
    %484 = vector.load %arg2[%c0_164, %c0_165, %c0_166] : memref<8x8x8xf32, #tpu.memory_space<vmem>>, vector<8x8x8xf32>
    %485 = vector.shape_cast %484 : vector<8x8x8xf32> to vector<64x8xf32>
    %486 = arith.addf %483, %485 : vector<64x8xf32>
    %487 = vector.extract_strided_slice %482 {offsets = [0, 8], sizes = [64, 8], strides = [1, 1]} : vector<64x16xf32> to vector<64x8xf32>
    %cst_167 = arith.constant 0.000000e+00 : f32
    %488 = vector.broadcast %cst_167 : f32 to vector<64x8xf32>
    %489 = arith.maximumf %487, %488 : vector<64x8xf32>
    %490 = vector.broadcast %cst_167 : f32 to vector<64x8xf32>
    %491 = arith.subf %487, %490 : vector<64x8xf32>
    %492 = arith.cmpf one, %491, %491 : vector<64x8xf32>
    %493 = vector.broadcast %cst_167 : f32 to vector<64x8xf32>
    %494 = arith.addf %487, %493 : vector<64x8xf32>
    %495 = math.absf %491 : vector<64x8xf32>
    %cst_168 = arith.constant 0.000000e+00 : f32
    %496 = vector.broadcast %cst_168 : f32 to vector<64x8xf32>
    %497 = arith.subf %496, %495 : vector<64x8xf32>
    %498 = math.exp %497 : vector<64x8xf32>
    %499 = math.log1p %498 : vector<64x8xf32>
    %500 = arith.addf %489, %499 : vector<64x8xf32>
    %501 = arith.select %492, %494, %500 : vector<64x8xi1>, vector<64x8xf32>
    %cst_169 = arith.constant 9.99999997E-7 : f32
    %502 = vector.broadcast %cst_169 : f32 to vector<64x8xf32>
    %503 = arith.addf %501, %502 : vector<64x8xf32>
    %504 = tpu.concatenate %486, %503 in 1 : vector<64x8xf32>, vector<64x8xf32> -> vector<64x16xf32>
    %505 = vector.shape_cast %504 : vector<64x16xf32> to vector<8x8x16xf32>
    %c0_170 = arith.constant 0 : index
    %c0_171 = arith.constant 0 : index
    %c0_172 = arith.constant 0 : index
    %506 = vector.load %arg14[%c0_170, %c0_171, %c0_172] : memref<8x8x16xf32, #tpu.memory_space<vmem>>, vector<8x8x16xf32>
    tpu.vector_store %arg14[%c0_170, %c0_171, %c0_172], %505 {strides = array<i32>} : memref<8x8x16xf32, #tpu.memory_space<vmem>>, vector<8x8x16xf32>,
    return
  }
  func.func @transform_0(%arg0: i32) -> (i32, i32, i32) {
    %c0_i32 = arith.constant 0 : i32
    %c0_i32_0 = arith.constant 0 : i32
    %c0_i32_1 = arith.constant 0 : i32
    return %c0_i32, %arg0, %c0_i32_0 : i32, i32, i32
  }
  func.func @transform_1(%arg0: i32) -> (i32, i32, i32) {
    %c0_i32 = arith.constant 0 : i32
    %c0_i32_0 = arith.constant 0 : i32
    %c0_i32_1 = arith.constant 0 : i32
    return %c0_i32, %arg0, %c0_i32_0 : i32, i32, i32
  }
  func.func @transform_2(%arg0: i32) -> (i32, i32, i32) {
    %c0_i32 = arith.constant 0 : i32
    %c0_i32_0 = arith.constant 0 : i32
    %c0_i32_1 = arith.constant 0 : i32
    return %c0_i32, %arg0, %c0_i32_0 : i32, i32, i32
  }
  func.func @transform_3(%arg0: i32) -> (i32, i32) {
    %c0_i32 = arith.constant 0 : i32
    %c0_i32_0 = arith.constant 0 : i32
    %c0_i32_1 = arith.constant 0 : i32
    return %c0_i32, %c0_i32_0 : i32, i32
  }
  func.func @transform_4(%arg0: i32) -> (i32, i32) {
    %c0_i32 = arith.constant 0 : i32
    %c0_i32_0 = arith.constant 0 : i32
    %c0_i32_1 = arith.constant 0 : i32
    return %c0_i32, %c0_i32_0 : i32, i32
  }
  func.func @transform_5(%arg0: i32) -> (i32, i32) {
    %c0_i32 = arith.constant 0 : i32
    %c0_i32_0 = arith.constant 0 : i32
    %c0_i32_1 = arith.constant 0 : i32
    return %c0_i32, %c0_i32_0 : i32, i32
  }
  func.func @transform_6(%arg0: i32) -> (i32, i32) {
    %c0_i32 = arith.constant 0 : i32
    %c0_i32_0 = arith.constant 0 : i32
    %c0_i32_1 = arith.constant 0 : i32
    return %c0_i32, %c0_i32_0 : i32, i32
  }
  func.func @transform_7(%arg0: i32) -> (i32, i32) {
    %c0_i32 = arith.constant 0 : i32
    %c0_i32_0 = arith.constant 0 : i32
    %c0_i32_1 = arith.constant 0 : i32
    return %c0_i32, %c0_i32_0 : i32, i32
  }
  func.func @transform_8(%arg0: i32) -> (i32, i32) {
    %c0_i32 = arith.constant 0 : i32
    %c0_i32_0 = arith.constant 0 : i32
    %c0_i32_1 = arith.constant 0 : i32
    return %c0_i32, %c0_i32_0 : i32, i32
  }
  func.func @transform_9(%arg0: i32) -> (i32, i32) {
    %c0_i32 = arith.constant 0 : i32
    %c0_i32_0 = arith.constant 0 : i32
    %c0_i32_1 = arith.constant 0 : i32
    return %c0_i32, %c0_i32_0 : i32, i32
  }
  func.func @transform_10(%arg0: i32) -> (i32, i32) {
    %c0_i32 = arith.constant 0 : i32
    %c0_i32_0 = arith.constant 0 : i32
    %c0_i32_1 = arith.constant 0 : i32
    return %c0_i32, %c0_i32_0 : i32, i32
  }
  func.func @transform_11(%arg0: i32) -> (i32, i32) {
    %c0_i32 = arith.constant 0 : i32
    %c0_i32_0 = arith.constant 0 : i32
    %c0_i32_1 = arith.constant 0 : i32
    return %c0_i32, %c0_i32_0 : i32, i32
  }
  func.func @transform_12(%arg0: i32) -> (i32, i32) {
    %c0_i32 = arith.constant 0 : i32
    %c0_i32_0 = arith.constant 0 : i32
    %c0_i32_1 = arith.constant 0 : i32
    return %c0_i32, %c0_i32_0 : i32, i32
  }
  func.func @transform_13(%arg0: i32) -> (i32, i32, i32) {
    %c0_i32 = arith.constant 0 : i32
    %c0_i32_0 = arith.constant 0 : i32
    %c0_i32_1 = arith.constant 0 : i32
    return %c0_i32, %arg0, %c0_i32_0 : i32, i32, i32
  }
  func.func @transform_14(%arg0: i32) -> (i32, i32, i32) {
    %c0_i32 = arith.constant 0 : i32
    %c0_i32_0 = arith.constant 0 : i32
    %c0_i32_1 = arith.constant 0 : i32
    return %c0_i32, %arg0, %c0_i32_0 : i32, i32, i32
  }
}

</mosaic_0001>

<llo_original>
// kernel: tpu_custom_call.1
$region0: #{tpu_custom_call.1}
  #allocation0 [shape = 'u32[]', space=smem, size = 0x4, offset = 0x4, fixed_abs, tag = 'smem constant byte address 0x4 - core index']
  #allocation1 [shape = 'u32[72,128]{1,0:T(1,128)}', space=vmem, size = 0x9000, scoped, tag = 'internal scratch']
  #allocation2 [shape = 'f32[64,96]{1,0:T(8,128)}', space=vmem, size = 0x8000, scoped, tag = 'scratch operand']
  #allocation3 [shape = 'f32[64,32]{1,0:T(8,128)}', space=vmem, size = 0x8000, scoped, tag = 'scratch operand']
  %s0 = inlined_call_operand.hbm [shape: f32[8,8,12], index: 0, kind: input, shape index: {}]
  %s1 = inlined_call_operand.hbm [shape: f32[8,8,8], index: 1, kind: input, shape index: {}]
  %s2 = inlined_call_operand.vmem [shape: f32[2,8,32], index: 2, kind: input, shape index: {}]
  %s3 = inlined_call_operand.hbm [shape: f32[12,96], index: 3, kind: input, shape index: {}]
  %s4 = inlined_call_operand.vmem [shape: f32[32,96], index: 4, kind: input, shape index: {}]
  %s5 = inlined_call_operand.vmem [shape: f32[1,96], index: 5, kind: input, shape index: {}]
  %s6 = inlined_call_operand.vmem [shape: f32[1,32], index: 6, kind: input, shape index: {}]
  %s7 = inlined_call_operand.hbm [shape: f32[32,96], index: 7, kind: input, shape index: {}]
  %s8 = inlined_call_operand.hbm [shape: f32[32,96], index: 8, kind: input, shape index: {}]
  %s9 = inlined_call_operand.vmem [shape: f32[1,96], index: 9, kind: input, shape index: {}]
  %s10 = inlined_call_operand.vmem [shape: f32[1,32], index: 10, kind: input, shape index: {}]
  %s11 = inlined_call_operand.vmem [shape: f32[32,16], index: 11, kind: input, shape index: {}]
  %s12 = inlined_call_operand.vmem [shape: f32[1,16], index: 12, kind: input, shape index: {}]
  %s13 = inlined_call_operand.hbm [shape: f32[8,8,16], index: 13, kind: output, shape index: {0}]
  %s14 = inlined_call_operand.hbm [shape: f32[2,8,32], index: 14, kind: output, shape index: {1}]
  %15 = xla_tuple %s13, %s14
  %s16 = sld [smem:[#allocation0]]
  $region90: #{tpu_custom_call.1} parent=0
    _
  %s18 = ssub.s32 1, %s16
  %s19 = scalar_select 0, %s18, %s16
  $region1: #{tpu_custom_call.1} parent=0
    #allocation4 [shape = 'u8[32768]{0}', space=vmem, size = 0x8000, scoped, tag = 'input window, operand 0, single buffered']
    #allocation5 [shape = 's32[1]{0}', space=sflag, size = 0x4, scoped, tag = 'scoped memory for tpu_custom_call.1']
    #allocation6 [shape = 's32[1]{0}', space=sflag, size = 0x4, scoped, tag = 'scoped memory for tpu_custom_call.1']
    #allocation7 [shape = 'u8[32768]{0}', space=vmem, size = 0x8000, scoped, tag = 'input window, operand 1, single buffered']
    #allocation8 [shape = 's32[1]{0}', space=sflag, size = 0x4, scoped, tag = 'scoped memory for tpu_custom_call.1']
    #allocation9 [shape = 'u8[8192]{0}', space=vmem, size = 0x2000, scoped, tag = 'input window, operand 3, single buffered']
    #allocation10 [shape = 'u8[16384]{0}', space=vmem, size = 0x4000, scoped, tag = 'input window, operand 7, single buffered']
    #allocation11 [shape = 's32[1]{0}', space=sflag, size = 0x4, scoped, tag = 'scoped memory for tpu_custom_call.1']
    #allocation12 [shape = 'u8[16384]{0}', space=vmem, size = 0x4000, scoped, tag = 'input window, operand 8, single buffered']
    #allocation13 [shape = 'u8[32768]{0}', space=vmem, size = 0x8000, scoped, tag = 'output window, operand 0, single buffered']
    #allocation14 [shape = 'u8[8192]{0}', space=vmem, size = 0x2000, scoped, tag = 'output window, operand 1, single buffered']
    #allocation15 [shape = 's32[1]{0}', space=sflag, size = 0x4, scoped, tag = 'scoped memory for tpu_custom_call.1']
    %20 = vsyncpa [#allocation5], 0
    %21 = vsyncpa [#allocation8], 0
    %22 = vsyncpa [#allocation11], 0
    %23 = vsyncpa [#allocation6], 0
    %24 = vsyncpa [#allocation15], 0
    // Predicated region
    $region2: #{tpu_custom_call.1} parent=1 // pred_check
      _
    $region3: #{tpu_custom_call.1} parent=1 // pred_check_branch
      %26 = sbr.rel (0) target = $region5
    $region4: #{tpu_custom_call.1} parent=1 // pred_region
      %28 = vsyncadd [#allocation5], 0
      %s29 = sshll.u32 %s0, 4
      %s30 = int_to_ptr.hbm [resolvable:$true] %s29
      %s31 = sshll.u32 [#allocation4], 4
      %s32 = int_to_ptr.vmem [resolvable:$true] %s31
      %37 = dma.hbm_to_vmem [thread:$0]  %s30, 1024, %s32, [#allocation5], 128, 128, 8
    $region5: #{tpu_custom_call.1} parent=1 // pred_fallthru
      _
    // Predicated region
    $region6: #{tpu_custom_call.1} parent=1 // pred_check
      _
    $region7: #{tpu_custom_call.1} parent=1 // pred_check_branch
      %39 = sbr.rel (0) target = $region9
    $region8: #{tpu_custom_call.1} parent=1 // pred_region
      %41 = vsyncadd [#allocation8], 0
      %s42 = sshll.u32 %s1, 4
      %s43 = int_to_ptr.hbm [resolvable:$true] %s42
      %s44 = sshll.u32 [#allocation7], 4
      %s45 = int_to_ptr.vmem [resolvable:$true] %s44
      %50 = dma.hbm_to_vmem [thread:$0]  %s43, 1024, %s45, [#allocation8], 128, 128, 8
    $region9: #{tpu_custom_call.1} parent=1 // pred_fallthru
      _
    // Predicated region
    $region10: #{tpu_custom_call.1} parent=1 // pred_check
      _
    $region11: #{tpu_custom_call.1} parent=1 // pred_check_branch
      %52 = sbr.rel (0) target = $region13
    $region12: #{tpu_custom_call.1} parent=1 // pred_region
      _
    $region13: #{tpu_custom_call.1} parent=1 // pred_fallthru
      _
    // Predicated region
    $region14: #{tpu_custom_call.1} parent=1 // pred_check
      _
    $region15: #{tpu_custom_call.1} parent=1 // pred_check_branch
      %54 = sbr.rel (0) target = $region17
    $region16: #{tpu_custom_call.1} parent=1 // pred_region
      %56 = vsyncadd [#allocation8], 0
      %s57 = sshll.u32 %s3, 4
      %s58 = int_to_ptr.hbm [resolvable:$true] %s57
      %s59 = sshll.u32 [#allocation9], 4
      %s60 = int_to_ptr.vmem [resolvable:$true] %s59
      %65 = dma.hbm_to_vmem [thread:$0]  %s58, 256, %s60, [#allocation8], 128, 128, 8
    $region17: #{tpu_custom_call.1} parent=1 // pred_fallthru
      _
    // Predicated region
    $region18: #{tpu_custom_call.1} parent=1 // pred_check
      _
    $region19: #{tpu_custom_call.1} parent=1 // pred_check_branch
      %67 = sbr.rel (0) target = $region21
    $region20: #{tpu_custom_call.1} parent=1 // pred_region
      _
    $region21: #{tpu_custom_call.1} parent=1 // pred_fallthru
      _
    // Predicated region
    $region22: #{tpu_custom_call.1} parent=1 // pred_check
      _
    $region23: #{tpu_custom_call.1} parent=1 // pred_check_branch
      %69 = sbr.rel (0) target = $region25
    $region24: #{tpu_custom_call.1} parent=1 // pred_region
      _
    $region25: #{tpu_custom_call.1} parent=1 // pred_fallthru
      _
    // Predicated region
    $region26: #{tpu_custom_call.1} parent=1 // pred_check
      _
    $region27: #{tpu_custom_call.1} parent=1 // pred_check_branch
      %71 = sbr.rel (0) target = $region29
    $region28: #{tpu_custom_call.1} parent=1 // pred_region
      _
    $region29: #{tpu_custom_call.1} parent=1 // pred_fallthru
      _
    // Predicated region
    $region30: #{tpu_custom_call.1} parent=1 // pred_check
      _
    $region31: #{tpu_custom_call.1} parent=1 // pred_check_branch
      %73 = sbr.rel (0) target = $region33
    $region32: #{tpu_custom_call.1} parent=1 // pred_region
      %75 = vsyncadd [#allocation11], 0
      %s76 = sshll.u32 %s7, 4
      %s77 = int_to_ptr.hbm [resolvable:$true] %s76
      %s78 = sshll.u32 [#allocation10], 4
      %s79 = int_to_ptr.vmem [resolvable:$true] %s78
      %84 = dma.hbm_to_vmem [thread:$0]  %s77, 512, %s79, [#allocation11], 128, 128, 8
    $region33: #{tpu_custom_call.1} parent=1 // pred_fallthru
      _
    // Predicated region
    $region34: #{tpu_custom_call.1} parent=1 // pred_check
      _
    $region35: #{tpu_custom_call.1} parent=1 // pred_check_branch
      %86 = sbr.rel (0) target = $region37
    $region36: #{tpu_custom_call.1} parent=1 // pred_region
      %88 = vsyncadd [#allocation11], 0
      %s89 = sshll.u32 %s8, 4
      %s90 = int_to_ptr.hbm [resolvable:$true] %s89
      %s91 = sshll.u32 [#allocation12], 4
      %s92 = int_to_ptr.vmem [resolvable:$true] %s91
      %97 = dma.hbm_to_vmem [thread:$0]  %s90, 512, %s92, [#allocation11], 128, 128, 8
    $region37: #{tpu_custom_call.1} parent=1 // pred_fallthru
      _
    // Predicated region
    $region38: #{tpu_custom_call.1} parent=1 // pred_check
      _
    $region39: #{tpu_custom_call.1} parent=1 // pred_check_branch
      %99 = sbr.rel (0) target = $region41
    $region40: #{tpu_custom_call.1} parent=1 // pred_region
      _
    $region41: #{tpu_custom_call.1} parent=1 // pred_fallthru
      _
    // Predicated region
    $region42: #{tpu_custom_call.1} parent=1 // pred_check
      _
    $region43: #{tpu_custom_call.1} parent=1 // pred_check_branch
      %101 = sbr.rel (0) target = $region45
    $region44: #{tpu_custom_call.1} parent=1 // pred_region
      _
    $region45: #{tpu_custom_call.1} parent=1 // pred_fallthru
      _
    // Predicated region
    $region46: #{tpu_custom_call.1} parent=1 // pred_check
      _
    $region47: #{tpu_custom_call.1} parent=1 // pred_check_branch
      %103 = sbr.rel (0) target = $region49
    $region48: #{tpu_custom_call.1} parent=1 // pred_region
      _
    $region49: #{tpu_custom_call.1} parent=1 // pred_fallthru
      _
    // Predicated region
    $region50: #{tpu_custom_call.1} parent=1 // pred_check
      _
    $region51: #{tpu_custom_call.1} parent=1 // pred_check_branch
      %105 = sbr.rel (0) target = $region53
    $region52: #{tpu_custom_call.1} parent=1 // pred_region
      _
    $region53: #{tpu_custom_call.1} parent=1 // pred_fallthru
      _
    // Predicated region
    $region54: #{tpu_custom_call.1} parent=1 // pred_check
      _
    $region55: #{tpu_custom_call.1} parent=1 // pred_check_branch
      %107 = sbr.rel (0) target = $region57
    $region56: #{tpu_custom_call.1} parent=1 // pred_region
      %109 = dma.done [#allocation5], 1024
    $region57: #{tpu_custom_call.1} parent=1 // pred_fallthru
      _
    // Predicated region
    $region58: #{tpu_custom_call.1} parent=1 // pred_check
      _
    $region59: #{tpu_custom_call.1} parent=1 // pred_check_branch
      %111 = sbr.rel (0) target = $region61
    $region60: #{tpu_custom_call.1} parent=1 // pred_region
      %113 = dma.done [#allocation8], 1024
    $region61: #{tpu_custom_call.1} parent=1 // pred_fallthru
      _
    // Predicated region
    $region62: #{tpu_custom_call.1} parent=1 // pred_check
      _
    $region63: #{tpu_custom_call.1} parent=1 // pred_check_branch
      %115 = sbr.rel (0) target = $region65
    $region64: #{tpu_custom_call.1} parent=1 // pred_region
      %117 = dma.done [#allocation8], 256
    $region65: #{tpu_custom_call.1} parent=1 // pred_fallthru
      _
    // Predicated region
    $region66: #{tpu_custom_call.1} parent=1 // pred_check
      _
    $region67: #{tpu_custom_call.1} parent=1 // pred_check_branch
      %119 = sbr.rel (0) target = $region69
    $region68: #{tpu_custom_call.1} parent=1 // pred_region
      %121 = dma.done [#allocation11], 512
    $region69: #{tpu_custom_call.1} parent=1 // pred_fallthru
      _
    // Predicated region
    $region70: #{tpu_custom_call.1} parent=1 // pred_check
      _
    $region71: #{tpu_custom_call.1} parent=1 // pred_check_branch
      %123 = sbr.rel (0) target = $region73
    $region72: #{tpu_custom_call.1} parent=1 // pred_region
      %125 = dma.done [#allocation11], 512
    $region73: #{tpu_custom_call.1} parent=1 // pred_fallthru
      _
    %v126 = vld [vmem:[#allocation4] sm:$0xff]
    %v127 = vld [vmem:[#allocation4 + $0x8] sm:$0xff]
    %v128 = vld [vmem:[#allocation4 + $0x10] sm:$0xff]
    %v129 = vld [vmem:[#allocation4 + $0x18] sm:$0xff]
    %v130 = vld [vmem:[#allocation4 + $0x20] sm:$0xff]
    %v131 = vld [vmem:[#allocation4 + $0x28] sm:$0xff]
    %v132 = vld [vmem:[#allocation4 + $0x30] sm:$0xff]
    %v133 = vld [vmem:[#allocation4 + $0x38] sm:$0xff]
    %v134 = vld [vmem:[#allocation9] sm:$0xff]
    %v135 = vld [vmem:[#allocation9 + $0x8] sm:$0xf]
    %v136 = vld [vmem:[%s5] sm:$0x1]
    %v138 = vperm.slane %v136, 0
    %vm140 = vcmask 97280
    %v142 = vsel %vm140, %v126, 0
    %v145 = vsel %vm140, %v127, 0
    %v148 = vsel %vm140, %v128, 0
    %v151 = vsel %vm140, %v129, 0
    %v154 = vsel %vm140, %v130, 0
    %v157 = vsel %vm140, %v131, 0
    %v160 = vsel %vm140, %v132, 0
    %v163 = vsel %vm140, %v133, 0
    %vm165 = vcmask 1043456
    %v167 = vsel %vm165, %v135, 0
    %169 = vmatpush.msra.mxu0 0.0
    %170 = vmatpush.msra.mxu0 0.0
    %171 = vmatpush.msra.mxu0 0.0
    %172 = vmatpush.msra.mxu0 0.0
    %173 = vmatpush.msra.mxu0 0.0
    %174 = vmatpush.msra.mxu0 0.0
    %175 = vmatpush.msra.mxu0 0.0
    %176 = vmatpush.msra.mxu0 0.0
    %177 = vmatpush.msra.mxu0 0.0
    %178 = vmatpush.msra.mxu0 0.0
    %179 = vmatpush.msra.mxu0 0.0
    %180 = vmatpush.msra.mxu0 0.0
    %181 = vmatpush.msra.mxu0 0.0
    %182 = vmatpush.msra.mxu0 0.0
    %183 = vmatpush.msra.mxu0 %v167
    %184 = vmatpush.msra.mxu0 %v134
    %185 = vmatmul.f32.gmra.mxu0 %v142
    %v186 = vpop.f32.mrf.mxu0
    %v187 = vadd.f32 %v138, %v186
    %188 = vmatmul.f32.gmra.mxu0 %v145
    %v189 = vpop.f32.mrf.mxu0
    %v190 = vadd.f32 %v138, %v189
    %191 = vmatmul.f32.gmra.mxu0 %v148
    %v192 = vpop.f32.mrf.mxu0
    %v193 = vadd.f32 %v138, %v192
    %194 = vmatmul.f32.gmra.mxu0 %v151
    %v195 = vpop.f32.mrf.mxu0
    %v196 = vadd.f32 %v138, %v195
    %197 = vmatmul.f32.gmra.mxu0 %v154
    %v198 = vpop.f32.mrf.mxu0
    %v199 = vadd.f32 %v138, %v198
    %200 = vmatmul.f32.gmra.mxu0 %v157
    %v201 = vpop.f32.mrf.mxu0
    %v202 = vadd.f32 %v138, %v201
    %203 = vmatmul.f32.gmra.mxu0 %v160
    %v204 = vpop.f32.mrf.mxu0
    %v205 = vadd.f32 %v138, %v204
    %206 = vmatmul.f32.gmra.mxu0 %v163
    %v207 = vpop.f32.mrf.mxu0
    %v208 = vadd.f32 %v138, %v207
    %209 = vdwg.mxu0
    %vm210 = vcmask 785408
    %211 = vst.msk [vmem:[#allocation2] sm:$0xff] %vm210, %v187
    %212 = vst.msk [vmem:[#allocation2 + $0x8] sm:$0xff] %vm210, %v190
    %213 = vst.msk [vmem:[#allocation2 + $0x10] sm:$0xff] %vm210, %v193
    %214 = vst.msk [vmem:[#allocation2 + $0x18] sm:$0xff] %vm210, %v196
    %215 = vst.msk [vmem:[#allocation2 + $0x20] sm:$0xff] %vm210, %v199
    %216 = vst.msk [vmem:[#allocation2 + $0x28] sm:$0xff] %vm210, %v202
    %217 = vst.msk [vmem:[#allocation2 + $0x30] sm:$0xff] %vm210, %v205
    %218 = vst.msk [vmem:[#allocation2 + $0x38] sm:$0xff] %vm210, %v208
    %v219 = vld [vmem:[%s4] sm:$0xff]
    %v220 = vld [vmem:[%s4 + $0x8] sm:$0xff]
    %v221 = vld [vmem:[%s4 + $0x10] sm:$0xff]
    %v222 = vld [vmem:[%s4 + $0x18] sm:$0xff]
    %v223 = vld [vmem:[%s6] sm:$0x1]
    %v224 = vld [vmem:[%s2] sm:$0xff]
    %vm225 = vcmask 261120
    %v227 = vsel %vm225, %v224, 0
    %229 = vmatpush.msra.mxu0 0.0
    %230 = vmatpush.msra.mxu0 0.0
    %231 = vmatpush.msra.mxu0 0.0
    %232 = vmatpush.msra.mxu0 0.0
    %233 = vmatpush.msra.mxu0 0.0
    %234 = vmatpush.msra.mxu0 0.0
    %235 = vmatpush.msra.mxu0 0.0
    %236 = vmatpush.msra.mxu0 0.0
    %237 = vmatpush.msra.mxu0 0.0
    %238 = vmatpush.msra.mxu0 0.0
    %239 = vmatpush.msra.mxu0 0.0
    %240 = vmatpush.msra.mxu0 0.0
    %241 = vmatpush.msra.mxu0 %v222
    %242 = vmatpush.msra.mxu0 %v221
    %243 = vmatpush.msra.mxu0 %v220
    %244 = vmatpush.msra.mxu0 %v219
    %245 = vmatmul.f32.gmra.mxu0 %v227
    %v246 = vpop.f32.mrf.mxu0
    %v247 = vadd.f32 0.0, %v246
    %248 = vdwg.mxu0
    %v249 = vld [vmem:[#allocation2] sm:$0xff]
    %v250 = vadd.f32 %v249, %v247
    %v251 = vxor.u32 %v250, 2147483648
    %v252 = vmul.f32 %v251, 1.442695
    %v253 = vpow.pop %v252
    %v254 = vadd.f32 %v253, 1.0
    %v255 = vrcp.pop %v254
    %v256 = vmul.f32 %v254, %v255
    %v257 = vsub.f32 1.0, %v256
    %v258 = vmul.f32 %v255, %v257
    %v259 = vadd.f32 %v255, %v258
    %vm260 = vweird.f32 %v254
    %vm261 = vweird.f32 %v255
    %vm262 = vmor %vm260, %vm261
    %v263 = vsel %vm262, %v255, %v259
    %v264 = vand.u32 2147483647, %v254
    %vm265 = vcmp.eq.f32.partialorder %v264, 8.507059e+37
    %v266 = vand.u32 %v254, 2147483648
    %v267 = vor.u32 1.1754944e-38, %v266
    %v268 = vsel %vm265, %v267, %v263
    %v269 = vmul.f32 1.0, %v268
    %v271 = vperm.slane %v223, 0
    %272 = vrot.lane.b32.xlu0 %v271, 64
    %v273 = vpop.permute.xlu0 %272
    %v275 = vadd.f32 %v247, %v273
    %277 = vrot.lane.b32.xlu0 %v275, 64
    %v278 = vpop.permute.xlu0 %277
    %v280 = vmul.f32 %v269, %v278
    %282 = vrot.lane.b32.xlu0 %v280, 64
    %v283 = vpop.permute.xlu0 %282
    %v285 = vadd.f32 %v249, %v283
    %v286 = vtanh.pop %v285
    %v287 = vsub.f32 1.0, %v269
    %289 = vrot.lane.b32.xlu0 %v286, 96
    %v290 = vpop.permute.xlu0 %289
    %v292 = vmul.f32 %v287, %v290
    %293 = vrot.lane.b32.xlu0 %v224, 32
    %v294 = vpop.permute.xlu0 %293
    %v296 = vmul.f32 %v269, %v294
    %v297 = vadd.f32 %v292, %v296
    %299 = vrot.lane.b32.xlu0 %v297, 96
    %v300 = vpop.permute.xlu0 %299
    %302 = vst.msk [vmem:[#allocation3] sm:$0xff] %vm225, %v300
    %v303 = vsel %vm225, %v300, 0
    %305 = vmatpush.msra.mxu0 0.0
    %306 = vmatpush.msra.mxu0 0.0
    %307 = vmatpush.msra.mxu0 0.0
    %308 = vmatpush.msra.mxu0 0.0
    %309 = vmatpush.msra.mxu0 0.0
    %310 = vmatpush.msra.mxu0 0.0
    %311 = vmatpush.msra.mxu0 0.0
    %312 = vmatpush.msra.mxu0 0.0
    %313 = vmatpush.msra.mxu0 0.0
    %314 = vmatpush.msra.mxu0 0.0
    %315 = vmatpush.msra.mxu0 0.0
    %316 = vmatpush.msra.mxu0 0.0
    %317 = vmatpush.msra.mxu0 %v222
    %318 = vmatpush.msra.mxu0 %v221
    %319 = vmatpush.msra.mxu0 %v220
    %320 = vmatpush.msra.mxu0 %v219
    %321 = vmatmul.f32.gmra.mxu0 %v303
    %v322 = vpop.f32.mrf.mxu0
    %v323 = vadd.f32 0.0, %v322
    %324 = vdwg.mxu0
    %v325 = vld [vmem:[#allocation2 + $0x8] sm:$0xff]
    %v326 = vadd.f32 %v325, %v323
    %v327 = vxor.u32 %v326, 2147483648
    %v328 = vmul.f32 %v327, 1.442695
    %v329 = vpow.pop %v328
    %v330 = vadd.f32 %v329, 1.0
    %v331 = vrcp.pop %v330
    %v332 = vmul.f32 %v330, %v331
    %v333 = vsub.f32 1.0, %v332
    %v334 = vmul.f32 %v331, %v333
    %v335 = vadd.f32 %v331, %v334
    %vm336 = vweird.f32 %v330
    %vm337 = vweird.f32 %v331
    %vm338 = vmor %vm336, %vm337
    %v339 = vsel %vm338, %v331, %v335
    %v340 = vand.u32 2147483647, %v330
    %vm341 = vcmp.eq.f32.partialorder %v340, 8.507059e+37
    %v342 = vand.u32 %v330, 2147483648
    %v343 = vor.u32 1.1754944e-38, %v342
    %v344 = vsel %vm341, %v343, %v339
    %v345 = vmul.f32 1.0, %v344
    %v346 = vadd.f32 %v323, %v273
    %348 = vrot.lane.b32.xlu0 %v346, 64
    %v349 = vpop.permute.xlu0 %348
    %v351 = vmul.f32 %v345, %v349
    %353 = vrot.lane.b32.xlu0 %v351, 64
    %v354 = vpop.permute.xlu0 %353
    %v356 = vadd.f32 %v325, %v354
    %v357 = vtanh.pop %v356
    %v358 = vsub.f32 1.0, %v345
    %360 = vrot.lane.b32.xlu0 %v357, 96
    %v361 = vpop.permute.xlu0 %360
    %v363 = vmul.f32 %v358, %v361
    %v364 = vmul.f32 %v345, %v297
    %v365 = vadd.f32 %v363, %v364
    %367 = vrot.lane.b32.xlu0 %v365, 96
    %v368 = vpop.permute.xlu0 %367
    %370 = vst.msk [vmem:[#allocation3 + $0x8] sm:$0xff] %vm225, %v368
    %v371 = vsel %vm225, %v368, 0
    %373 = vmatpush.msra.mxu0 0.0
    %374 = vmatpush.msra.mxu0 0.0
    %375 = vmatpush.msra.mxu0 0.0
    %376 = vmatpush.msra.mxu0 0.0
    %377 = vmatpush.msra.mxu0 0.0
    %378 = vmatpush.msra.mxu0 0.0
    %379 = vmatpush.msra.mxu0 0.0
    %380 = vmatpush.msra.mxu0 0.0
    %381 = vmatpush.msra.mxu0 0.0
    %382 = vmatpush.msra.mxu0 0.0
    %383 = vmatpush.msra.mxu0 0.0
    %384 = vmatpush.msra.mxu0 0.0
    %385 = vmatpush.msra.mxu0 %v222
    %386 = vmatpush.msra.mxu0 %v221
    %387 = vmatpush.msra.mxu0 %v220
    %388 = vmatpush.msra.mxu0 %v219
    %389 = vmatmul.f32.gmra.mxu0 %v371
    %v390 = vpop.f32.mrf.mxu0
    %v391 = vadd.f32 0.0, %v390
    %392 = vdwg.mxu0
    %v393 = vld [vmem:[#allocation2 + $0x10] sm:$0xff]
    %v394 = vadd.f32 %v393, %v391
    %v395 = vxor.u32 %v394, 2147483648
    %v396 = vmul.f32 %v395, 1.442695
    %v397 = vpow.pop %v396
    %v398 = vadd.f32 %v397, 1.0
    %v399 = vrcp.pop %v398
    %v400 = vmul.f32 %v398, %v399
    %v401 = vsub.f32 1.0, %v400
    %v402 = vmul.f32 %v399, %v401
    %v403 = vadd.f32 %v399, %v402
    %vm404 = vweird.f32 %v398
    %vm405 = vweird.f32 %v399
    %vm406 = vmor %vm404, %vm405
    %v407 = vsel %vm406, %v399, %v403
    %v408 = vand.u32 2147483647, %v398
    %vm409 = vcmp.eq.f32.partialorder %v408, 8.507059e+37
    %v410 = vand.u32 %v398, 2147483648
    %v411 = vor.u32 1.1754944e-38, %v410
    %v412 = vsel %vm409, %v411, %v407
    %v413 = vmul.f32 1.0, %v412
    %v414 = vadd.f32 %v391, %v273
    %416 = vrot.lane.b32.xlu0 %v414, 64
    %v417 = vpop.permute.xlu0 %416
    %v419 = vmul.f32 %v413, %v417
    %421 = vrot.lane.b32.xlu0 %v419, 64
    %v422 = vpop.permute.xlu0 %421
    %v424 = vadd.f32 %v393, %v422
    %v425 = vtanh.pop %v424
    %v426 = vsub.f32 1.0, %v413
    %428 = vrot.lane.b32.xlu0 %v425, 96
    %v429 = vpop.permute.xlu0 %428
    %v431 = vmul.f32 %v426, %v429
    %v432 = vmul.f32 %v413, %v365
    %v433 = vadd.f32 %v431, %v432
    %435 = vrot.lane.b32.xlu0 %v433, 96
    %v436 = vpop.permute.xlu0 %435
    %438 = vst.msk [vmem:[#allocation3 + $0x10] sm:$0xff] %vm225, %v436
    %v439 = vsel %vm225, %v436, 0
    %441 = vmatpush.msra.mxu0 0.0
    %442 = vmatpush.msra.mxu0 0.0
    %443 = vmatpush.msra.mxu0 0.0
    %444 = vmatpush.msra.mxu0 0.0
    %445 = vmatpush.msra.mxu0 0.0
    %446 = vmatpush.msra.mxu0 0.0
    %447 = vmatpush.msra.mxu0 0.0
    %448 = vmatpush.msra.mxu0 0.0
    %449 = vmatpush.msra.mxu0 0.0
    %450 = vmatpush.msra.mxu0 0.0
    %451 = vmatpush.msra.mxu0 0.0
    %452 = vmatpush.msra.mxu0 0.0
    %453 = vmatpush.msra.mxu0 %v222
    %454 = vmatpush.msra.mxu0 %v221
    %455 = vmatpush.msra.mxu0 %v220
    %456 = vmatpush.msra.mxu0 %v219
    %457 = vmatmul.f32.gmra.mxu0 %v439
    %v458 = vpop.f32.mrf.mxu0
    %v459 = vadd.f32 0.0, %v458
    %460 = vdwg.mxu0
    %v461 = vld [vmem:[#allocation2 + $0x18] sm:$0xff]
    %v462 = vadd.f32 %v461, %v459
    %v463 = vxor.u32 %v462, 2147483648
    %v464 = vmul.f32 %v463, 1.442695
    %v465 = vpow.pop %v464
    %v466 = vadd.f32 %v465, 1.0
    %v467 = vrcp.pop %v466
    %v468 = vmul.f32 %v466, %v467
    %v469 = vsub.f32 1.0, %v468
    %v470 = vmul.f32 %v467, %v469
    %v471 = vadd.f32 %v467, %v470
    %vm472 = vweird.f32 %v466
    %vm473 = vweird.f32 %v467
    %vm474 = vmor %vm472, %vm473
    %v475 = vsel %vm474, %v467, %v471
    %v476 = vand.u32 2147483647, %v466
    %vm477 = vcmp.eq.f32.partialorder %v476, 8.507059e+37
    %v478 = vand.u32 %v466, 2147483648
    %v479 = vor.u32 1.1754944e-38, %v478
    %v480 = vsel %vm477, %v479, %v475
    %v481 = vmul.f32 1.0, %v480
    %v482 = vadd.f32 %v459, %v273
    %484 = vrot.lane.b32.xlu0 %v482, 64
    %v485 = vpop.permute.xlu0 %484
    %v487 = vmul.f32 %v481, %v485
    %489 = vrot.lane.b32.xlu0 %v487, 64
    %v490 = vpop.permute.xlu0 %489
    %v492 = vadd.f32 %v461, %v490
    %v493 = vtanh.pop %v492
    %v494 = vsub.f32 1.0, %v481
    %496 = vrot.lane.b32.xlu0 %v493, 96
    %v497 = vpop.permute.xlu0 %496
    %v499 = vmul.f32 %v494, %v497
    %v500 = vmul.f32 %v481, %v433
    %v501 = vadd.f32 %v499, %v500
    %503 = vrot.lane.b32.xlu0 %v501, 96
    %v504 = vpop.permute.xlu0 %503
    %506 = vst.msk [vmem:[#allocation3 + $0x18] sm:$0xff] %vm225, %v504
    %v507 = vsel %vm225, %v504, 0
    %509 = vmatpush.msra.mxu0 0.0
    %510 = vmatpush.msra.mxu0 0.0
    %511 = vmatpush.msra.mxu0 0.0
    %512 = vmatpush.msra.mxu0 0.0
    %513 = vmatpush.msra.mxu0 0.0
    %514 = vmatpush.msra.mxu0 0.0
    %515 = vmatpush.msra.mxu0 0.0
    %516 = vmatpush.msra.mxu0 0.0
    %517 = vmatpush.msra.mxu0 0.0
    %518 = vmatpush.msra.mxu0 0.0
    %519 = vmatpush.msra.mxu0 0.0
    %520 = vmatpush.msra.mxu0 0.0
    %521 = vmatpush.msra.mxu0 %v222
    %522 = vmatpush.msra.mxu0 %v221
    %523 = vmatpush.msra.mxu0 %v220
    %524 = vmatpush.msra.mxu0 %v219
    %525 = vmatmul.f32.gmra.mxu0 %v507
    %v526 = vpop.f32.mrf.mxu0
    %v527 = vadd.f32 0.0, %v526
    %528 = vdwg.mxu0
    %v529 = vld [vmem:[#allocation2 + $0x20] sm:$0xff]
    %v530 = vadd.f32 %v529, %v527
    %v531 = vxor.u32 %v530, 2147483648
    %v532 = vmul.f32 %v531, 1.442695
    %v533 = vpow.pop %v532
    %v534 = vadd.f32 %v533, 1.0
    %v535 = vrcp.pop %v534
    %v536 = vmul.f32 %v534, %v535
    %v537 = vsub.f32 1.0, %v536
    %v538 = vmul.f32 %v535, %v537
    %v539 = vadd.f32 %v535, %v538
    %vm540 = vweird.f32 %v534
    %vm541 = vweird.f32 %v535
    %vm542 = vmor %vm540, %vm541
    %v543 = vsel %vm542, %v535, %v539
    %v544 = vand.u32 2147483647, %v534
    %vm545 = vcmp.eq.f32.partialorder %v544, 8.507059e+37
    %v546 = vand.u32 %v534, 2147483648
    %v547 = vor.u32 1.1754944e-38, %v546
    %v548 = vsel %vm545, %v547, %v543
    %v549 = vmul.f32 1.0, %v548
    %v550 = vadd.f32 %v527, %v273
    %552 = vrot.lane.b32.xlu0 %v550, 64
    %v553 = vpop.permute.xlu0 %552
    %v555 = vmul.f32 %v549, %v553
    %557 = vrot.lane.b32.xlu0 %v555, 64
    %v558 = vpop.permute.xlu0 %557
    %v560 = vadd.f32 %v529, %v558
    %v561 = vtanh.pop %v560
    %v562 = vsub.f32 1.0, %v549
    %564 = vrot.lane.b32.xlu0 %v561, 96
    %v565 = vpop.permute.xlu0 %564
    %v567 = vmul.f32 %v562, %v565
    %v568 = vmul.f32 %v549, %v501
    %v569 = vadd.f32 %v567, %v568
    %571 = vrot.lane.b32.xlu0 %v569, 96
    %v572 = vpop.permute.xlu0 %571
    %574 = vst.msk [vmem:[#allocation3 + $0x20] sm:$0xff] %vm225, %v572
    %v575 = vsel %vm225, %v572, 0
    %577 = vmatpush.msra.mxu0 0.0
    %578 = vmatpush.msra.mxu0 0.0
    %579 = vmatpush.msra.mxu0 0.0
    %580 = vmatpush.msra.mxu0 0.0
    %581 = vmatpush.msra.mxu0 0.0
    %582 = vmatpush.msra.mxu0 0.0
    %583 = vmatpush.msra.mxu0 0.0
    %584 = vmatpush.msra.mxu0 0.0
    %585 = vmatpush.msra.mxu0 0.0
    %586 = vmatpush.msra.mxu0 0.0
    %587 = vmatpush.msra.mxu0 0.0
    %588 = vmatpush.msra.mxu0 0.0
    %589 = vmatpush.msra.mxu0 %v222
    %590 = vmatpush.msra.mxu0 %v221
    %591 = vmatpush.msra.mxu0 %v220
    %592 = vmatpush.msra.mxu0 %v219
    %593 = vmatmul.f32.gmra.mxu0 %v575
    %v594 = vpop.f32.mrf.mxu0
    %v595 = vadd.f32 0.0, %v594
    %596 = vdwg.mxu0
    %v597 = vld [vmem:[#allocation2 + $0x28] sm:$0xff]
    %v598 = vadd.f32 %v597, %v595
    %v599 = vxor.u32 %v598, 2147483648
    %v600 = vmul.f32 %v599, 1.442695
    %v601 = vpow.pop %v600
    %v602 = vadd.f32 %v601, 1.0
    %v603 = vrcp.pop %v602
    %v604 = vmul.f32 %v602, %v603
    %v605 = vsub.f32 1.0, %v604
    %v606 = vmul.f32 %v603, %v605
    %v607 = vadd.f32 %v603, %v606
    %vm608 = vweird.f32 %v602
    %vm609 = vweird.f32 %v603
    %vm610 = vmor %vm608, %vm609
    %v611 = vsel %vm610, %v603, %v607
    %v612 = vand.u32 2147483647, %v602
    %vm613 = vcmp.eq.f32.partialorder %v612, 8.507059e+37
    %v614 = vand.u32 %v602, 2147483648
    %v615 = vor.u32 1.1754944e-38, %v614
    %v616 = vsel %vm613, %v615, %v611
    %v617 = vmul.f32 1.0, %v616
    %v618 = vadd.f32 %v595, %v273
    %620 = vrot.lane.b32.xlu0 %v618, 64
    %v621 = vpop.permute.xlu0 %620
    %v623 = vmul.f32 %v617, %v621
    %625 = vrot.lane.b32.xlu0 %v623, 64
    %v626 = vpop.permute.xlu0 %625
    %v628 = vadd.f32 %v597, %v626
    %v629 = vtanh.pop %v628
    %v630 = vsub.f32 1.0, %v617
    %632 = vrot.lane.b32.xlu0 %v629, 96
    %v633 = vpop.permute.xlu0 %632
    %v635 = vmul.f32 %v630, %v633
    %v636 = vmul.f32 %v617, %v569
    %v637 = vadd.f32 %v635, %v636
    %639 = vrot.lane.b32.xlu0 %v637, 96
    %v640 = vpop.permute.xlu0 %639
    %642 = vst.msk [vmem:[#allocation3 + $0x28] sm:$0xff] %vm225, %v640
    %v643 = vsel %vm225, %v640, 0
    %645 = vmatpush.msra.mxu0 0.0
    %646 = vmatpush.msra.mxu0 0.0
    %647 = vmatpush.msra.mxu0 0.0
    %648 = vmatpush.msra.mxu0 0.0
    %649 = vmatpush.msra.mxu0 0.0
    %650 = vmatpush.msra.mxu0 0.0
    %651 = vmatpush.msra.mxu0 0.0
    %652 = vmatpush.msra.mxu0 0.0
    %653 = vmatpush.msra.mxu0 0.0
    %654 = vmatpush.msra.mxu0 0.0
    %655 = vmatpush.msra.mxu0 0.0
    %656 = vmatpush.msra.mxu0 0.0
    %657 = vmatpush.msra.mxu0 %v222
    %658 = vmatpush.msra.mxu0 %v221
    %659 = vmatpush.msra.mxu0 %v220
    %660 = vmatpush.msra.mxu0 %v219
    %661 = vmatmul.f32.gmra.mxu0 %v643
    %v662 = vpop.f32.mrf.mxu0
    %v663 = vadd.f32 0.0, %v662
    %664 = vdwg.mxu0
    %v665 = vld [vmem:[#allocation2 + $0x30] sm:$0xff]
    %v666 = vadd.f32 %v665, %v663
    %v667 = vxor.u32 %v666, 2147483648
    %v668 = vmul.f32 %v667, 1.442695
    %v669 = vpow.pop %v668
    %v670 = vadd.f32 %v669, 1.0
    %v671 = vrcp.pop %v670
    %v672 = vmul.f32 %v670, %v671
    %v673 = vsub.f32 1.0, %v672
    %v674 = vmul.f32 %v671, %v673
    %v675 = vadd.f32 %v671, %v674
    %vm676 = vweird.f32 %v670
    %vm677 = vweird.f32 %v671
    %vm678 = vmor %vm676, %vm677
    %v679 = vsel %vm678, %v671, %v675
    %v680 = vand.u32 2147483647, %v670
    %vm681 = vcmp.eq.f32.partialorder %v680, 8.507059e+37
    %v682 = vand.u32 %v670, 2147483648
    %v683 = vor.u32 1.1754944e-38, %v682
    %v684 = vsel %vm681, %v683, %v679
    %v685 = vmul.f32 1.0, %v684
    %v686 = vadd.f32 %v663, %v273
    %688 = vrot.lane.b32.xlu0 %v686, 64
    %v689 = vpop.permute.xlu0 %688
    %v691 = vmul.f32 %v685, %v689
    %693 = vrot.lane.b32.xlu0 %v691, 64
    %v694 = vpop.permute.xlu0 %693
    %v696 = vadd.f32 %v665, %v694
    %v697 = vtanh.pop %v696
    %v698 = vsub.f32 1.0, %v685
    %700 = vrot.lane.b32.xlu0 %v697, 96
    %v701 = vpop.permute.xlu0 %700
    %v703 = vmul.f32 %v698, %v701
    %v704 = vmul.f32 %v685, %v637
    %v705 = vadd.f32 %v703, %v704
    %707 = vrot.lane.b32.xlu0 %v705, 96
    %v708 = vpop.permute.xlu0 %707
    %710 = vst.msk [vmem:[#allocation3 + $0x30] sm:$0xff] %vm225, %v708
    %v711 = vsel %vm225, %v708, 0
    %713 = vmatpush.msra.mxu0 0.0
    %714 = vmatpush.msra.mxu0 0.0
    %715 = vmatpush.msra.mxu0 0.0
    %716 = vmatpush.msra.mxu0 0.0
    %717 = vmatpush.msra.mxu0 0.0
    %718 = vmatpush.msra.mxu0 0.0
    %719 = vmatpush.msra.mxu0 0.0
    %720 = vmatpush.msra.mxu0 0.0
    %721 = vmatpush.msra.mxu0 0.0
    %722 = vmatpush.msra.mxu0 0.0
    %723 = vmatpush.msra.mxu0 0.0
    %724 = vmatpush.msra.mxu0 0.0
    %725 = vmatpush.msra.mxu0 %v222
    %726 = vmatpush.msra.mxu0 %v221
    %727 = vmatpush.msra.mxu0 %v220
    %728 = vmatpush.msra.mxu0 %v219
    %729 = vmatmul.f32.gmra.mxu0 %v711
    %v730 = vpop.f32.mrf.mxu0
    %v731 = vadd.f32 0.0, %v730
    %732 = vdwg.mxu0
    %v733 = vld [vmem:[#allocation2 + $0x38] sm:$0xff]
    %v734 = vadd.f32 %v733, %v731
    %v735 = vxor.u32 %v734, 2147483648
    %v736 = vmul.f32 %v735, 1.442695
    %v737 = vpow.pop %v736
    %v738 = vadd.f32 %v737, 1.0
    %v739 = vrcp.pop %v738
    %v740 = vmul.f32 %v738, %v739
    %v741 = vsub.f32 1.0, %v740
    %v742 = vmul.f32 %v739, %v741
    %v743 = vadd.f32 %v739, %v742
    %vm744 = vweird.f32 %v738
    %vm745 = vweird.f32 %v739
    %vm746 = vmor %vm744, %vm745
    %v747 = vsel %vm746, %v739, %v743
    %v748 = vand.u32 2147483647, %v738
    %vm749 = vcmp.eq.f32.partialorder %v748, 8.507059e+37
    %v750 = vand.u32 %v738, 2147483648
    %v751 = vor.u32 1.1754944e-38, %v750
    %v752 = vsel %vm749, %v751, %v747
    %v753 = vmul.f32 1.0, %v752
    %v754 = vadd.f32 %v731, %v273
    %756 = vrot.lane.b32.xlu0 %v754, 64
    %v757 = vpop.permute.xlu0 %756
    %v759 = vmul.f32 %v753, %v757
    %761 = vrot.lane.b32.xlu0 %v759, 64
    %v762 = vpop.permute.xlu0 %761
    %v764 = vadd.f32 %v733, %v762
    %v765 = vtanh.pop %v764
    %v766 = vsub.f32 1.0, %v753
    %768 = vrot.lane.b32.xlu0 %v765, 96
    %v769 = vpop.permute.xlu0 %768
    %v771 = vmul.f32 %v766, %v769
    %v772 = vmul.f32 %v753, %v705
    %v773 = vadd.f32 %v771, %v772
    %775 = vrot.lane.b32.xlu0 %v773, 96
    %v776 = vpop.permute.xlu0 %775
    %778 = vst.msk [vmem:[#allocation3 + $0x38] sm:$0xff] %vm225, %v776
    %779 = vst.msk [vmem:[#allocation14] sm:$0xff] %vm225, %v776
    %v780 = vld [vmem:[#allocation3] sm:$0xff]
    %v781 = vld [vmem:[#allocation3 + $0x8] sm:$0xff]
    %v782 = vld [vmem:[#allocation3 + $0x10] sm:$0xff]
    %v783 = vld [vmem:[#allocation3 + $0x18] sm:$0xff]
    %v784 = vld [vmem:[#allocation3 + $0x20] sm:$0xff]
    %v785 = vld [vmem:[#allocation3 + $0x28] sm:$0xff]
    %v786 = vld [vmem:[#allocation3 + $0x30] sm:$0xff]
    %v787 = vld [vmem:[#allocation3 + $0x38] sm:$0xff]
    %v788 = vld [vmem:[#allocation10] sm:$0xff]
    %v789 = vld [vmem:[#allocation10 + $0x8] sm:$0xff]
    %v790 = vld [vmem:[#allocation10 + $0x10] sm:$0xff]
    %v791 = vld [vmem:[#allocation10 + $0x18] sm:$0xff]
    %v792 = vld [vmem:[%s9] sm:$0x1]
    %v794 = vperm.slane %v792, 0
    %v797 = vsel %vm225, %v780, 0
    %v800 = vsel %vm225, %v781, 0
    %v803 = vsel %vm225, %v782, 0
    %v806 = vsel %vm225, %v783, 0
    %v809 = vsel %vm225, %v784, 0
    %v812 = vsel %vm225, %v785, 0
    %v815 = vsel %vm225, %v786, 0
    %v818 = vsel %vm225, %v787, 0
    %820 = vmatpush.msra.mxu0 0.0
    %821 = vmatpush.msra.mxu0 0.0
    %822 = vmatpush.msra.mxu0 0.0
    %823 = vmatpush.msra.mxu0 0.0
    %824 = vmatpush.msra.mxu0 0.0
    %825 = vmatpush.msra.mxu0 0.0
    %826 = vmatpush.msra.mxu0 0.0
    %827 = vmatpush.msra.mxu0 0.0
    %828 = vmatpush.msra.mxu0 0.0
    %829 = vmatpush.msra.mxu0 0.0
    %830 = vmatpush.msra.mxu0 0.0
    %831 = vmatpush.msra.mxu0 0.0
    %832 = vmatpush.msra.mxu0 %v791
    %833 = vmatpush.msra.mxu0 %v790
    %834 = vmatpush.msra.mxu0 %v789
    %835 = vmatpush.msra.mxu0 %v788
    %836 = vmatmul.f32.gmra.mxu0 %v797
    %v837 = vpop.f32.mrf.mxu0
    %v838 = vadd.f32 %v794, %v837
    %839 = vmatmul.f32.gmra.mxu0 %v800
    %v840 = vpop.f32.mrf.mxu0
    %v841 = vadd.f32 %v794, %v840
    %842 = vmatmul.f32.gmra.mxu0 %v803
    %v843 = vpop.f32.mrf.mxu0
    %v844 = vadd.f32 %v794, %v843
    %845 = vmatmul.f32.gmra.mxu0 %v806
    %v846 = vpop.f32.mrf.mxu0
    %v847 = vadd.f32 %v794, %v846
    %848 = vmatmul.f32.gmra.mxu0 %v809
    %v849 = vpop.f32.mrf.mxu0
    %v850 = vadd.f32 %v794, %v849
    %851 = vmatmul.f32.gmra.mxu0 %v812
    %v852 = vpop.f32.mrf.mxu0
    %v853 = vadd.f32 %v794, %v852
    %854 = vmatmul.f32.gmra.mxu0 %v815
    %v855 = vpop.f32.mrf.mxu0
    %v856 = vadd.f32 %v794, %v855
    %857 = vmatmul.f32.gmra.mxu0 %v818
    %v858 = vpop.f32.mrf.mxu0
    %v859 = vadd.f32 %v794, %v858
    %860 = vdwg.mxu0
    %861 = vst.msk [vmem:[#allocation2] sm:$0xff] %vm210, %v838
    %862 = vst.msk [vmem:[#allocation2 + $0x8] sm:$0xff] %vm210, %v841
    %863 = vst.msk [vmem:[#allocation2 + $0x10] sm:$0xff] %vm210, %v844
    %864 = vst.msk [vmem:[#allocation2 + $0x18] sm:$0xff] %vm210, %v847
    %865 = vst.msk [vmem:[#allocation2 + $0x20] sm:$0xff] %vm210, %v850
    %866 = vst.msk [vmem:[#allocation2 + $0x28] sm:$0xff] %vm210, %v853
    %867 = vst.msk [vmem:[#allocation2 + $0x30] sm:$0xff] %vm210, %v856
    %868 = vst.msk [vmem:[#allocation2 + $0x38] sm:$0xff] %vm210, %v859
    %v869 = vld [vmem:[#allocation12] sm:$0xff]
    %v870 = vld [vmem:[#allocation12 + $0x8] sm:$0xff]
    %v871 = vld [vmem:[#allocation12 + $0x10] sm:$0xff]
    %v872 = vld [vmem:[#allocation12 + $0x18] sm:$0xff]
    %v873 = vld [vmem:[%s10] sm:$0x1]
    %s874 = scalar_lea.vmem %s2, 8
    %v875 = vld [vmem:[%s874] sm:$0xff]
    %v877 = vsel %vm225, %v875, 0
    %879 = vmatpush.msra.mxu0 0.0
    %880 = vmatpush.msra.mxu0 0.0
    %881 = vmatpush.msra.mxu0 0.0
    %882 = vmatpush.msra.mxu0 0.0
    %883 = vmatpush.msra.mxu0 0.0
    %884 = vmatpush.msra.mxu0 0.0
    %885 = vmatpush.msra.mxu0 0.0
    %886 = vmatpush.msra.mxu0 0.0
    %887 = vmatpush.msra.mxu0 0.0
    %888 = vmatpush.msra.mxu0 0.0
    %889 = vmatpush.msra.mxu0 0.0
    %890 = vmatpush.msra.mxu0 0.0
    %891 = vmatpush.msra.mxu0 %v872
    %892 = vmatpush.msra.mxu0 %v871
    %893 = vmatpush.msra.mxu0 %v870
    %894 = vmatpush.msra.mxu0 %v869
    %895 = vmatmul.f32.gmra.mxu0 %v877
    %v896 = vpop.f32.mrf.mxu0
    %v897 = vadd.f32 0.0, %v896
    %898 = vdwg.mxu0
    %v899 = vld [vmem:[#allocation2] sm:$0xff]
    %v900 = vadd.f32 %v899, %v897
    %v901 = vxor.u32 %v900, 2147483648
    %v902 = vmul.f32 %v901, 1.442695
    %v903 = vpow.pop %v902
    %v904 = vadd.f32 %v903, 1.0
    %v905 = vrcp.pop %v904
    %v906 = vmul.f32 %v904, %v905
    %v907 = vsub.f32 1.0, %v906
    %v908 = vmul.f32 %v905, %v907
    %v909 = vadd.f32 %v905, %v908
    %vm910 = vweird.f32 %v904
    %vm911 = vweird.f32 %v905
    %vm912 = vmor %vm910, %vm911
    %v913 = vsel %vm912, %v905, %v909
    %v914 = vand.u32 2147483647, %v904
    %vm915 = vcmp.eq.f32.partialorder %v914, 8.507059e+37
    %v916 = vand.u32 %v904, 2147483648
    %v917 = vor.u32 1.1754944e-38, %v916
    %v918 = vsel %vm915, %v917, %v913
    %v919 = vmul.f32 1.0, %v918
    %v921 = vperm.slane %v873, 0
    %922 = vrot.lane.b32.xlu0 %v921, 64
    %v923 = vpop.permute.xlu0 %922
    %v925 = vadd.f32 %v897, %v923
    %927 = vrot.lane.b32.xlu0 %v925, 64
    %v928 = vpop.permute.xlu0 %927
    %v930 = vmul.f32 %v919, %v928
    %932 = vrot.lane.b32.xlu0 %v930, 64
    %v933 = vpop.permute.xlu0 %932
    %v935 = vadd.f32 %v899, %v933
    %v936 = vtanh.pop %v935
    %v937 = vsub.f32 1.0, %v919
    %939 = vrot.lane.b32.xlu0 %v936, 96
    %v940 = vpop.permute.xlu0 %939
    %v942 = vmul.f32 %v937, %v940
    %943 = vrot.lane.b32.xlu0 %v875, 32
    %v944 = vpop.permute.xlu0 %943
    %v946 = vmul.f32 %v919, %v944
    %v947 = vadd.f32 %v942, %v946
    %949 = vrot.lane.b32.xlu0 %v947, 96
    %v950 = vpop.permute.xlu0 %949
    %952 = vst.msk [vmem:[#allocation3] sm:$0xff] %vm225, %v950
    %v953 = vsel %vm225, %v950, 0
    %955 = vmatpush.msra.mxu0 0.0
    %956 = vmatpush.msra.mxu0 0.0
    %957 = vmatpush.msra.mxu0 0.0
    %958 = vmatpush.msra.mxu0 0.0
    %959 = vmatpush.msra.mxu0 0.0
    %960 = vmatpush.msra.mxu0 0.0
    %961 = vmatpush.msra.mxu0 0.0
    %962 = vmatpush.msra.mxu0 0.0
    %963 = vmatpush.msra.mxu0 0.0
    %964 = vmatpush.msra.mxu0 0.0
    %965 = vmatpush.msra.mxu0 0.0
    %966 = vmatpush.msra.mxu0 0.0
    %967 = vmatpush.msra.mxu0 %v872
    %968 = vmatpush.msra.mxu0 %v871
    %969 = vmatpush.msra.mxu0 %v870
    %970 = vmatpush.msra.mxu0 %v869
    %971 = vmatmul.f32.gmra.mxu0 %v953
    %v972 = vpop.f32.mrf.mxu0
    %v973 = vadd.f32 0.0, %v972
    %974 = vdwg.mxu0
    %v975 = vld [vmem:[#allocation2 + $0x8] sm:$0xff]
    %v976 = vadd.f32 %v975, %v973
    %v977 = vxor.u32 %v976, 2147483648
    %v978 = vmul.f32 %v977, 1.442695
    %v979 = vpow.pop %v978
    %v980 = vadd.f32 %v979, 1.0
    %v981 = vrcp.pop %v980
    %v982 = vmul.f32 %v980, %v981
    %v983 = vsub.f32 1.0, %v982
    %v984 = vmul.f32 %v981, %v983
    %v985 = vadd.f32 %v981, %v984
    %vm986 = vweird.f32 %v980
    %vm987 = vweird.f32 %v981
    %vm988 = vmor %vm986, %vm987
    %v989 = vsel %vm988, %v981, %v985
    %v990 = vand.u32 2147483647, %v980
    %vm991 = vcmp.eq.f32.partialorder %v990, 8.507059e+37
    %v992 = vand.u32 %v980, 2147483648
    %v993 = vor.u32 1.1754944e-38, %v992
    %v994 = vsel %vm991, %v993, %v989
    %v995 = vmul.f32 1.0, %v994
    %v996 = vadd.f32 %v973, %v923
    %998 = vrot.lane.b32.xlu0 %v996, 64
    %v999 = vpop.permute.xlu0 %998
    %v1001 = vmul.f32 %v995, %v999
    %1003 = vrot.lane.b32.xlu0 %v1001, 64
    %v1004 = vpop.permute.xlu0 %1003
    %v1006 = vadd.f32 %v975, %v1004
    %v1007 = vtanh.pop %v1006
    %v1008 = vsub.f32 1.0, %v995
    %1010 = vrot.lane.b32.xlu0 %v1007, 96
    %v1011 = vpop.permute.xlu0 %1010
    %v1013 = vmul.f32 %v1008, %v1011
    %v1014 = vmul.f32 %v995, %v947
    %v1015 = vadd.f32 %v1013, %v1014
    %1017 = vrot.lane.b32.xlu0 %v1015, 96
    %v1018 = vpop.permute.xlu0 %1017
    %1020 = vst.msk [vmem:[#allocation3 + $0x8] sm:$0xff] %vm225, %v1018
    %v1021 = vsel %vm225, %v1018, 0
    %1023 = vmatpush.msra.mxu0 0.0
    %1024 = vmatpush.msra.mxu0 0.0
    %1025 = vmatpush.msra.mxu0 0.0
    %1026 = vmatpush.msra.mxu0 0.0
    %1027 = vmatpush.msra.mxu0 0.0
    %1028 = vmatpush.msra.mxu0 0.0
    %1029 = vmatpush.msra.mxu0 0.0
    %1030 = vmatpush.msra.mxu0 0.0
    %1031 = vmatpush.msra.mxu0 0.0
    %1032 = vmatpush.msra.mxu0 0.0
    %1033 = vmatpush.msra.mxu0 0.0
    %1034 = vmatpush.msra.mxu0 0.0
    %1035 = vmatpush.msra.mxu0 %v872
    %1036 = vmatpush.msra.mxu0 %v871
    %1037 = vmatpush.msra.mxu0 %v870
    %1038 = vmatpush.msra.mxu0 %v869
    %1039 = vmatmul.f32.gmra.mxu0 %v1021
    %v1040 = vpop.f32.mrf.mxu0
    %v1041 = vadd.f32 0.0, %v1040
    %1042 = vdwg.mxu0
    %v1043 = vld [vmem:[#allocation2 + $0x10] sm:$0xff]
    %v1044 = vadd.f32 %v1043, %v1041
    %v1045 = vxor.u32 %v1044, 2147483648
    %v1046 = vmul.f32 %v1045, 1.442695
    %v1047 = vpow.pop %v1046
    %v1048 = vadd.f32 %v1047, 1.0
    %v1049 = vrcp.pop %v1048
    %v1050 = vmul.f32 %v1048, %v1049
    %v1051 = vsub.f32 1.0, %v1050
    %v1052 = vmul.f32 %v1049, %v1051
    %v1053 = vadd.f32 %v1049, %v1052
    %vm1054 = vweird.f32 %v1048
    %vm1055 = vweird.f32 %v1049
    %vm1056 = vmor %vm1054, %vm1055
    %v1057 = vsel %vm1056, %v1049, %v1053
    %v1058 = vand.u32 2147483647, %v1048
    %vm1059 = vcmp.eq.f32.partialorder %v1058, 8.507059e+37
    %v1060 = vand.u32 %v1048, 2147483648
    %v1061 = vor.u32 1.1754944e-38, %v1060
    %v1062 = vsel %vm1059, %v1061, %v1057
    %v1063 = vmul.f32 1.0, %v1062
    %v1064 = vadd.f32 %v1041, %v923
    %1066 = vrot.lane.b32.xlu0 %v1064, 64
    %v1067 = vpop.permute.xlu0 %1066
    %v1069 = vmul.f32 %v1063, %v1067
    %1071 = vrot.lane.b32.xlu0 %v1069, 64
    %v1072 = vpop.permute.xlu0 %1071
    %v1074 = vadd.f32 %v1043, %v1072
    %v1075 = vtanh.pop %v1074
    %v1076 = vsub.f32 1.0, %v1063
    %1078 = vrot.lane.b32.xlu0 %v1075, 96
    %v1079 = vpop.permute.xlu0 %1078
    %v1081 = vmul.f32 %v1076, %v1079
    %v1082 = vmul.f32 %v1063, %v1015
    %v1083 = vadd.f32 %v1081, %v1082
    %1085 = vrot.lane.b32.xlu0 %v1083, 96
    %v1086 = vpop.permute.xlu0 %1085
    %1088 = vst.msk [vmem:[#allocation3 + $0x10] sm:$0xff] %vm225, %v1086
    %v1089 = vsel %vm225, %v1086, 0
    %1091 = vmatpush.msra.mxu0 0.0
    %1092 = vmatpush.msra.mxu0 0.0
    %1093 = vmatpush.msra.mxu0 0.0
    %1094 = vmatpush.msra.mxu0 0.0
    %1095 = vmatpush.msra.mxu0 0.0
    %1096 = vmatpush.msra.mxu0 0.0
    %1097 = vmatpush.msra.mxu0 0.0
    %1098 = vmatpush.msra.mxu0 0.0
    %1099 = vmatpush.msra.mxu0 0.0
    %1100 = vmatpush.msra.mxu0 0.0
    %1101 = vmatpush.msra.mxu0 0.0
    %1102 = vmatpush.msra.mxu0 0.0
    %1103 = vmatpush.msra.mxu0 %v872
    %1104 = vmatpush.msra.mxu0 %v871
    %1105 = vmatpush.msra.mxu0 %v870
    %1106 = vmatpush.msra.mxu0 %v869
    %1107 = vmatmul.f32.gmra.mxu0 %v1089
    %v1108 = vpop.f32.mrf.mxu0
    %v1109 = vadd.f32 0.0, %v1108
    %1110 = vdwg.mxu0
    %v1111 = vld [vmem:[#allocation2 + $0x18] sm:$0xff]
    %v1112 = vadd.f32 %v1111, %v1109
    %v1113 = vxor.u32 %v1112, 2147483648
    %v1114 = vmul.f32 %v1113, 1.442695
    %v1115 = vpow.pop %v1114
    %v1116 = vadd.f32 %v1115, 1.0
    %v1117 = vrcp.pop %v1116
    %v1118 = vmul.f32 %v1116, %v1117
    %v1119 = vsub.f32 1.0, %v1118
    %v1120 = vmul.f32 %v1117, %v1119
    %v1121 = vadd.f32 %v1117, %v1120
    %vm1122 = vweird.f32 %v1116
    %vm1123 = vweird.f32 %v1117
    %vm1124 = vmor %vm1122, %vm1123
    %v1125 = vsel %vm1124, %v1117, %v1121
    %v1126 = vand.u32 2147483647, %v1116
    %vm1127 = vcmp.eq.f32.partialorder %v1126, 8.507059e+37
    %v1128 = vand.u32 %v1116, 2147483648
    %v1129 = vor.u32 1.1754944e-38, %v1128
    %v1130 = vsel %vm1127, %v1129, %v1125
    %v1131 = vmul.f32 1.0, %v1130
    %v1132 = vadd.f32 %v1109, %v923
    %1134 = vrot.lane.b32.xlu0 %v1132, 64
    %v1135 = vpop.permute.xlu0 %1134
    %v1137 = vmul.f32 %v1131, %v1135
    %1139 = vrot.lane.b32.xlu0 %v1137, 64
    %v1140 = vpop.permute.xlu0 %1139
    %v1142 = vadd.f32 %v1111, %v1140
    %v1143 = vtanh.pop %v1142
    %v1144 = vsub.f32 1.0, %v1131
    %1146 = vrot.lane.b32.xlu0 %v1143, 96
    %v1147 = vpop.permute.xlu0 %1146
    %v1149 = vmul.f32 %v1144, %v1147
    %v1150 = vmul.f32 %v1131, %v1083
    %v1151 = vadd.f32 %v1149, %v1150
    %1153 = vrot.lane.b32.xlu0 %v1151, 96
    %v1154 = vpop.permute.xlu0 %1153
    %1156 = vst.msk [vmem:[#allocation3 + $0x18] sm:$0xff] %vm225, %v1154
    %v1157 = vsel %vm225, %v1154, 0
    %1159 = vmatpush.msra.mxu0 0.0
    %1160 = vmatpush.msra.mxu0 0.0
    %1161 = vmatpush.msra.mxu0 0.0
    %1162 = vmatpush.msra.mxu0 0.0
    %1163 = vmatpush.msra.mxu0 0.0
    %1164 = vmatpush.msra.mxu0 0.0
    %1165 = vmatpush.msra.mxu0 0.0
    %1166 = vmatpush.msra.mxu0 0.0
    %1167 = vmatpush.msra.mxu0 0.0
    %1168 = vmatpush.msra.mxu0 0.0
    %1169 = vmatpush.msra.mxu0 0.0
    %1170 = vmatpush.msra.mxu0 0.0
    %1171 = vmatpush.msra.mxu0 %v872
    %1172 = vmatpush.msra.mxu0 %v871
    %1173 = vmatpush.msra.mxu0 %v870
    %1174 = vmatpush.msra.mxu0 %v869
    %1175 = vmatmul.f32.gmra.mxu0 %v1157
    %v1176 = vpop.f32.mrf.mxu0
    %v1177 = vadd.f32 0.0, %v1176
    %1178 = vdwg.mxu0
    %v1179 = vld [vmem:[#allocation2 + $0x20] sm:$0xff]
    %v1180 = vadd.f32 %v1179, %v1177
    %v1181 = vxor.u32 %v1180, 2147483648
    %v1182 = vmul.f32 %v1181, 1.442695
    %v1183 = vpow.pop %v1182
    %v1184 = vadd.f32 %v1183, 1.0
    %v1185 = vrcp.pop %v1184
    %v1186 = vmul.f32 %v1184, %v1185
    %v1187 = vsub.f32 1.0, %v1186
    %v1188 = vmul.f32 %v1185, %v1187
    %v1189 = vadd.f32 %v1185, %v1188
    %vm1190 = vweird.f32 %v1184
    %vm1191 = vweird.f32 %v1185
    %vm1192 = vmor %vm1190, %vm1191
    %v1193 = vsel %vm1192, %v1185, %v1189
    %v1194 = vand.u32 2147483647, %v1184
    %vm1195 = vcmp.eq.f32.partialorder %v1194, 8.507059e+37
    %v1196 = vand.u32 %v1184, 2147483648
    %v1197 = vor.u32 1.1754944e-38, %v1196
    %v1198 = vsel %vm1195, %v1197, %v1193
    %v1199 = vmul.f32 1.0, %v1198
    %v1200 = vadd.f32 %v1177, %v923
    %1202 = vrot.lane.b32.xlu0 %v1200, 64
    %v1203 = vpop.permute.xlu0 %1202
    %v1205 = vmul.f32 %v1199, %v1203
    %1207 = vrot.lane.b32.xlu0 %v1205, 64
    %v1208 = vpop.permute.xlu0 %1207
    %v1210 = vadd.f32 %v1179, %v1208
    %v1211 = vtanh.pop %v1210
    %v1212 = vsub.f32 1.0, %v1199
    %1214 = vrot.lane.b32.xlu0 %v1211, 96
    %v1215 = vpop.permute.xlu0 %1214
    %v1217 = vmul.f32 %v1212, %v1215
    %v1218 = vmul.f32 %v1199, %v1151
    %v1219 = vadd.f32 %v1217, %v1218
    %1221 = vrot.lane.b32.xlu0 %v1219, 96
    %v1222 = vpop.permute.xlu0 %1221
    %1224 = vst.msk [vmem:[#allocation3 + $0x20] sm:$0xff] %vm225, %v1222
    %v1225 = vsel %vm225, %v1222, 0
    %1227 = vmatpush.msra.mxu0 0.0
    %1228 = vmatpush.msra.mxu0 0.0
    %1229 = vmatpush.msra.mxu0 0.0
    %1230 = vmatpush.msra.mxu0 0.0
    %1231 = vmatpush.msra.mxu0 0.0
    %1232 = vmatpush.msra.mxu0 0.0
    %1233 = vmatpush.msra.mxu0 0.0
    %1234 = vmatpush.msra.mxu0 0.0
    %1235 = vmatpush.msra.mxu0 0.0
    %1236 = vmatpush.msra.mxu0 0.0
    %1237 = vmatpush.msra.mxu0 0.0
    %1238 = vmatpush.msra.mxu0 0.0
    %1239 = vmatpush.msra.mxu0 %v872
    %1240 = vmatpush.msra.mxu0 %v871
    %1241 = vmatpush.msra.mxu0 %v870
    %1242 = vmatpush.msra.mxu0 %v869
    %1243 = vmatmul.f32.gmra.mxu0 %v1225
    %v1244 = vpop.f32.mrf.mxu0
    %v1245 = vadd.f32 0.0, %v1244
    %1246 = vdwg.mxu0
    %v1247 = vld [vmem:[#allocation2 + $0x28] sm:$0xff]
    %v1248 = vadd.f32 %v1247, %v1245
    %v1249 = vxor.u32 %v1248, 2147483648
    %v1250 = vmul.f32 %v1249, 1.442695
    %v1251 = vpow.pop %v1250
    %v1252 = vadd.f32 %v1251, 1.0
    %v1253 = vrcp.pop %v1252
    %v1254 = vmul.f32 %v1252, %v1253
    %v1255 = vsub.f32 1.0, %v1254
    %v1256 = vmul.f32 %v1253, %v1255
    %v1257 = vadd.f32 %v1253, %v1256
    %vm1258 = vweird.f32 %v1252
    %vm1259 = vweird.f32 %v1253
    %vm1260 = vmor %vm1258, %vm1259
    %v1261 = vsel %vm1260, %v1253, %v1257
    %v1262 = vand.u32 2147483647, %v1252
    %vm1263 = vcmp.eq.f32.partialorder %v1262, 8.507059e+37
    %v1264 = vand.u32 %v1252, 2147483648
    %v1265 = vor.u32 1.1754944e-38, %v1264
    %v1266 = vsel %vm1263, %v1265, %v1261
    %v1267 = vmul.f32 1.0, %v1266
    %v1268 = vadd.f32 %v1245, %v923
    %1270 = vrot.lane.b32.xlu0 %v1268, 64
    %v1271 = vpop.permute.xlu0 %1270
    %v1273 = vmul.f32 %v1267, %v1271
    %1275 = vrot.lane.b32.xlu0 %v1273, 64
    %v1276 = vpop.permute.xlu0 %1275
    %v1278 = vadd.f32 %v1247, %v1276
    %v1279 = vtanh.pop %v1278
    %v1280 = vsub.f32 1.0, %v1267
    %1282 = vrot.lane.b32.xlu0 %v1279, 96
    %v1283 = vpop.permute.xlu0 %1282
    %v1285 = vmul.f32 %v1280, %v1283
    %v1286 = vmul.f32 %v1267, %v1219
    %v1287 = vadd.f32 %v1285, %v1286
    %1289 = vrot.lane.b32.xlu0 %v1287, 96
    %v1290 = vpop.permute.xlu0 %1289
    %1292 = vst.msk [vmem:[#allocation3 + $0x28] sm:$0xff] %vm225, %v1290
    %v1293 = vsel %vm225, %v1290, 0
    %1295 = vmatpush.msra.mxu0 0.0
    %1296 = vmatpush.msra.mxu0 0.0
    %1297 = vmatpush.msra.mxu0 0.0
    %1298 = vmatpush.msra.mxu0 0.0
    %1299 = vmatpush.msra.mxu0 0.0
    %1300 = vmatpush.msra.mxu0 0.0
    %1301 = vmatpush.msra.mxu0 0.0
    %1302 = vmatpush.msra.mxu0 0.0
    %1303 = vmatpush.msra.mxu0 0.0
    %1304 = vmatpush.msra.mxu0 0.0
    %1305 = vmatpush.msra.mxu0 0.0
    %1306 = vmatpush.msra.mxu0 0.0
    %1307 = vmatpush.msra.mxu0 %v872
    %1308 = vmatpush.msra.mxu0 %v871
    %1309 = vmatpush.msra.mxu0 %v870
    %1310 = vmatpush.msra.mxu0 %v869
    %1311 = vmatmul.f32.gmra.mxu0 %v1293
    %v1312 = vpop.f32.mrf.mxu0
    %v1313 = vadd.f32 0.0, %v1312
    %1314 = vdwg.mxu0
    %v1315 = vld [vmem:[#allocation2 + $0x30] sm:$0xff]
    %v1316 = vadd.f32 %v1315, %v1313
    %v1317 = vxor.u32 %v1316, 2147483648
    %v1318 = vmul.f32 %v1317, 1.442695
    %v1319 = vpow.pop %v1318
    %v1320 = vadd.f32 %v1319, 1.0
    %v1321 = vrcp.pop %v1320
    %v1322 = vmul.f32 %v1320, %v1321
    %v1323 = vsub.f32 1.0, %v1322
    %v1324 = vmul.f32 %v1321, %v1323
    %v1325 = vadd.f32 %v1321, %v1324
    %vm1326 = vweird.f32 %v1320
    %vm1327 = vweird.f32 %v1321
    %vm1328 = vmor %vm1326, %vm1327
    %v1329 = vsel %vm1328, %v1321, %v1325
    %v1330 = vand.u32 2147483647, %v1320
    %vm1331 = vcmp.eq.f32.partialorder %v1330, 8.507059e+37
    %v1332 = vand.u32 %v1320, 2147483648
    %v1333 = vor.u32 1.1754944e-38, %v1332
    %v1334 = vsel %vm1331, %v1333, %v1329
    %v1335 = vmul.f32 1.0, %v1334
    %v1336 = vadd.f32 %v1313, %v923
    %1338 = vrot.lane.b32.xlu0 %v1336, 64
    %v1339 = vpop.permute.xlu0 %1338
    %v1341 = vmul.f32 %v1335, %v1339
    %1343 = vrot.lane.b32.xlu0 %v1341, 64
    %v1344 = vpop.permute.xlu0 %1343
    %v1346 = vadd.f32 %v1315, %v1344
    %v1347 = vtanh.pop %v1346
    %v1348 = vsub.f32 1.0, %v1335
    %1350 = vrot.lane.b32.xlu0 %v1347, 96
    %v1351 = vpop.permute.xlu0 %1350
    %v1353 = vmul.f32 %v1348, %v1351
    %v1354 = vmul.f32 %v1335, %v1287
    %v1355 = vadd.f32 %v1353, %v1354
    %1357 = vrot.lane.b32.xlu0 %v1355, 96
    %v1358 = vpop.permute.xlu0 %1357
    %1360 = vst.msk [vmem:[#allocation3 + $0x30] sm:$0xff] %vm225, %v1358
    %v1361 = vsel %vm225, %v1358, 0
    %1363 = vmatpush.msra.mxu0 0.0
    %1364 = vmatpush.msra.mxu0 0.0
    %1365 = vmatpush.msra.mxu0 0.0
    %1366 = vmatpush.msra.mxu0 0.0
    %1367 = vmatpush.msra.mxu0 0.0
    %1368 = vmatpush.msra.mxu0 0.0
    %1369 = vmatpush.msra.mxu0 0.0
    %1370 = vmatpush.msra.mxu0 0.0
    %1371 = vmatpush.msra.mxu0 0.0
    %1372 = vmatpush.msra.mxu0 0.0
    %1373 = vmatpush.msra.mxu0 0.0
    %1374 = vmatpush.msra.mxu0 0.0
    %1375 = vmatpush.msra.mxu0 %v872
    %1376 = vmatpush.msra.mxu0 %v871
    %1377 = vmatpush.msra.mxu0 %v870
    %1378 = vmatpush.msra.mxu0 %v869
    %1379 = vmatmul.f32.gmra.mxu0 %v1361
    %v1380 = vpop.f32.mrf.mxu0
    %v1381 = vadd.f32 0.0, %v1380
    %1382 = vdwg.mxu0
    %v1383 = vld [vmem:[#allocation2 + $0x38] sm:$0xff]
    %v1384 = vadd.f32 %v1383, %v1381
    %v1385 = vxor.u32 %v1384, 2147483648
    %v1386 = vmul.f32 %v1385, 1.442695
    %v1387 = vpow.pop %v1386
    %v1388 = vadd.f32 %v1387, 1.0
    %v1389 = vrcp.pop %v1388
    %v1390 = vmul.f32 %v1388, %v1389
    %v1391 = vsub.f32 1.0, %v1390
    %v1392 = vmul.f32 %v1389, %v1391
    %v1393 = vadd.f32 %v1389, %v1392
    %vm1394 = vweird.f32 %v1388
    %vm1395 = vweird.f32 %v1389
    %vm1396 = vmor %vm1394, %vm1395
    %v1397 = vsel %vm1396, %v1389, %v1393
    %v1398 = vand.u32 2147483647, %v1388
    %vm1399 = vcmp.eq.f32.partialorder %v1398, 8.507059e+37
    %v1400 = vand.u32 %v1388, 2147483648
    %v1401 = vor.u32 1.1754944e-38, %v1400
    %v1402 = vsel %vm1399, %v1401, %v1397
    %v1403 = vmul.f32 1.0, %v1402
    %v1404 = vadd.f32 %v1381, %v923
    %1406 = vrot.lane.b32.xlu0 %v1404, 64
    %v1407 = vpop.permute.xlu0 %1406
    %v1409 = vmul.f32 %v1403, %v1407
    %1411 = vrot.lane.b32.xlu0 %v1409, 64
    %v1412 = vpop.permute.xlu0 %1411
    %v1414 = vadd.f32 %v1383, %v1412
    %v1415 = vtanh.pop %v1414
    %v1416 = vsub.f32 1.0, %v1403
    %1418 = vrot.lane.b32.xlu0 %v1415, 96
    %v1419 = vpop.permute.xlu0 %1418
    %v1421 = vmul.f32 %v1416, %v1419
    %v1422 = vmul.f32 %v1403, %v1355
    %v1423 = vadd.f32 %v1421, %v1422
    %1425 = vrot.lane.b32.xlu0 %v1423, 96
    %v1426 = vpop.permute.xlu0 %1425
    %1428 = vst.msk [vmem:[#allocation3 + $0x38] sm:$0xff] %vm225, %v1426
    %s1429 = scalar_lea.vmem [#allocation14], 8
    %1430 = vst.msk [vmem:[%s1429] sm:$0xff] %vm225, %v1426
    %v1431 = vld [vmem:[#allocation3] sm:$0xff]
    %v1432 = vld [vmem:[#allocation3 + $0x8] sm:$0xff]
    %v1433 = vld [vmem:[#allocation3 + $0x10] sm:$0xff]
    %v1434 = vld [vmem:[#allocation3 + $0x18] sm:$0xff]
    %v1435 = vld [vmem:[#allocation3 + $0x20] sm:$0xff]
    %v1436 = vld [vmem:[#allocation3 + $0x28] sm:$0xff]
    %v1437 = vld [vmem:[#allocation3 + $0x30] sm:$0xff]
    %v1438 = vld [vmem:[#allocation3 + $0x38] sm:$0xff]
    %v1439 = vld [vmem:[%s11] sm:$0xff]
    %v1440 = vld [vmem:[%s11 + $0x8] sm:$0xff]
    %v1441 = vld [vmem:[%s11 + $0x10] sm:$0xff]
    %v1442 = vld [vmem:[%s11 + $0x18] sm:$0xff]
    %v1443 = vld [vmem:[%s12] sm:$0x1]
    %v1445 = vperm.slane %v1443, 0
    %v1448 = vsel %vm225, %v1431, 0
    %v1451 = vsel %vm225, %v1432, 0
    %v1454 = vsel %vm225, %v1433, 0
    %v1457 = vsel %vm225, %v1434, 0
    %v1460 = vsel %vm225, %v1435, 0
    %v1463 = vsel %vm225, %v1436, 0
    %v1466 = vsel %vm225, %v1437, 0
    %v1469 = vsel %vm225, %v1438, 0
    %1471 = vmatpush.msra.mxu0 0.0
    %1472 = vmatpush.msra.mxu0 0.0
    %1473 = vmatpush.msra.mxu0 0.0
    %1474 = vmatpush.msra.mxu0 0.0
    %1475 = vmatpush.msra.mxu0 0.0
    %1476 = vmatpush.msra.mxu0 0.0
    %1477 = vmatpush.msra.mxu0 0.0
    %1478 = vmatpush.msra.mxu0 0.0
    %1479 = vmatpush.msra.mxu0 0.0
    %1480 = vmatpush.msra.mxu0 0.0
    %1481 = vmatpush.msra.mxu0 0.0
    %1482 = vmatpush.msra.mxu0 0.0
    %1483 = vmatpush.msra.mxu0 %v1442
    %1484 = vmatpush.msra.mxu0 %v1441
    %1485 = vmatpush.msra.mxu0 %v1440
    %1486 = vmatpush.msra.mxu0 %v1439
    %1487 = vmatmul.f32.gmra.mxu0 %v1448
    %v1488 = vpop.f32.mrf.mxu0
    %v1489 = vadd.f32 %v1445, %v1488
    %1490 = vmatmul.f32.gmra.mxu0 %v1451
    %v1491 = vpop.f32.mrf.mxu0
    %v1492 = vadd.f32 %v1445, %v1491
    %1493 = vmatmul.f32.gmra.mxu0 %v1454
    %v1494 = vpop.f32.mrf.mxu0
    %v1495 = vadd.f32 %v1445, %v1494
    %1496 = vmatmul.f32.gmra.mxu0 %v1457
    %v1497 = vpop.f32.mrf.mxu0
    %v1498 = vadd.f32 %v1445, %v1497
    %1499 = vmatmul.f32.gmra.mxu0 %v1460
    %v1500 = vpop.f32.mrf.mxu0
    %v1501 = vadd.f32 %v1445, %v1500
    %1502 = vmatmul.f32.gmra.mxu0 %v1463
    %v1503 = vpop.f32.mrf.mxu0
    %v1504 = vadd.f32 %v1445, %v1503
    %1505 = vmatmul.f32.gmra.mxu0 %v1466
    %v1506 = vpop.f32.mrf.mxu0
    %v1507 = vadd.f32 %v1445, %v1506
    %1508 = vmatmul.f32.gmra.mxu0 %v1469
    %v1509 = vpop.f32.mrf.mxu0
    %v1510 = vadd.f32 %v1445, %v1509
    %1511 = vdwg.mxu0
    %v1512 = vld [vmem:[#allocation7] sm:$0xff]
    %v1513 = vld [vmem:[#allocation7 + $0x8] sm:$0xff]
    %v1514 = vld [vmem:[#allocation7 + $0x10] sm:$0xff]
    %v1515 = vld [vmem:[#allocation7 + $0x18] sm:$0xff]
    %v1516 = vld [vmem:[#allocation7 + $0x20] sm:$0xff]
    %v1517 = vld [vmem:[#allocation7 + $0x28] sm:$0xff]
    %v1518 = vld [vmem:[#allocation7 + $0x30] sm:$0xff]
    %v1519 = vld [vmem:[#allocation7 + $0x38] sm:$0xff]
    %v1520 = vadd.f32 %v1489, %v1512
    %v1521 = vadd.f32 %v1492, %v1513
    %v1522 = vadd.f32 %v1495, %v1514
    %v1523 = vadd.f32 %v1498, %v1515
    %v1524 = vadd.f32 %v1501, %v1516
    %v1525 = vadd.f32 %v1504, %v1517
    %v1526 = vadd.f32 %v1507, %v1518
    %v1527 = vadd.f32 %v1510, %v1519
    %v1528 = vmax.f32 %v1489, 0.0
    %v1529 = vmax.f32 %v1492, 0.0
    %v1530 = vmax.f32 %v1495, 0.0
    %v1531 = vmax.f32 %v1498, 0.0
    %v1532 = vmax.f32 %v1501, 0.0
    %v1533 = vmax.f32 %v1504, 0.0
    %v1534 = vmax.f32 %v1507, 0.0
    %v1535 = vmax.f32 %v1510, 0.0
    %vm1536 = vcmp.ne.f32.partialorder %v1489, %v1489
    %vm1537 = vcmp.ne.f32.partialorder %v1492, %v1492
    %vm1538 = vcmp.ne.f32.partialorder %v1495, %v1495
    %vm1539 = vcmp.ne.f32.partialorder %v1498, %v1498
    %vm1540 = vcmp.ne.f32.partialorder %v1501, %v1501
    %vm1541 = vcmp.ne.f32.partialorder %v1504, %v1504
    %vm1542 = vcmp.ne.f32.partialorder %v1507, %v1507
    %vm1543 = vcmp.ne.f32.partialorder %v1510, %v1510
    %v1544 = vadd.f32 %v1489, 0.0
    %v1545 = vadd.f32 %v1492, 0.0
    %v1546 = vadd.f32 %v1495, 0.0
    %v1547 = vadd.f32 %v1498, 0.0
    %v1548 = vadd.f32 %v1501, 0.0
    %v1549 = vadd.f32 %v1504, 0.0
    %v1550 = vadd.f32 %v1507, 0.0
    %v1551 = vadd.f32 %v1510, 0.0
    %v1552 = vand.u32 2147483647, %v1489
    %v1553 = vand.u32 2147483647, %v1492
    %v1554 = vand.u32 2147483647, %v1495
    %v1555 = vand.u32 2147483647, %v1498
    %v1556 = vand.u32 2147483647, %v1501
    %v1557 = vand.u32 2147483647, %v1504
    %v1558 = vand.u32 2147483647, %v1507
    %v1559 = vand.u32 2147483647, %v1510
    %v1560 = vsub.f32 0.0, %v1552
    %v1561 = vsub.f32 0.0, %v1553
    %v1562 = vsub.f32 0.0, %v1554
    %v1563 = vsub.f32 0.0, %v1555
    %v1564 = vsub.f32 0.0, %v1556
    %v1565 = vsub.f32 0.0, %v1557
    %v1566 = vsub.f32 0.0, %v1558
    %v1567 = vsub.f32 0.0, %v1559
    %v1568 = vmul.f32 %v1560, 1.442695
    %v1569 = vpow.pop %v1568
    %v1570 = vmul.f32 %v1561, 1.442695
    %v1571 = vpow.pop %v1570
    %v1572 = vmul.f32 %v1562, 1.442695
    %v1573 = vpow.pop %v1572
    %v1574 = vmul.f32 %v1563, 1.442695
    %v1575 = vpow.pop %v1574
    %v1576 = vmul.f32 %v1564, 1.442695
    %v1577 = vpow.pop %v1576
    %v1578 = vmul.f32 %v1565, 1.442695
    %v1579 = vpow.pop %v1578
    %v1580 = vmul.f32 %v1566, 1.442695
    %v1581 = vpow.pop %v1580
    %v1582 = vmul.f32 %v1567, 1.442695
    %v1583 = vpow.pop %v1582
    %v1584 = vadd.f32 %v1569, 1.0
    %v1585 = vlog2.pop %v1584
    %v1586 = vmul.f32 %v1585, 0.6931472
    %v1587 = vmul.f32 -0.5, %v1569
    %v1588 = vadd.f32 %v1587, 1.0
    %v1589 = vmul.f32 %v1588, %v1569
    %v1590 = vand.u32 2147483647, %v1569
    %vm1591 = vcmp.lt.f32.partialorder %v1590, 0.0004427343
    %v1592 = vsel %vm1591, %v1589, %v1586
    %v1593 = vadd.f32 %v1571, 1.0
    %v1594 = vlog2.pop %v1593
    %v1595 = vmul.f32 %v1594, 0.6931472
    %v1596 = vmul.f32 -0.5, %v1571
    %v1597 = vadd.f32 %v1596, 1.0
    %v1598 = vmul.f32 %v1597, %v1571
    %v1599 = vand.u32 2147483647, %v1571
    %vm1600 = vcmp.lt.f32.partialorder %v1599, 0.0004427343
    %v1601 = vsel %vm1600, %v1598, %v1595
    %v1602 = vadd.f32 %v1573, 1.0
    %v1603 = vlog2.pop %v1602
    %v1604 = vmul.f32 %v1603, 0.6931472
    %v1605 = vmul.f32 -0.5, %v1573
    %v1606 = vadd.f32 %v1605, 1.0
    %v1607 = vmul.f32 %v1606, %v1573
    %v1608 = vand.u32 2147483647, %v1573
    %vm1609 = vcmp.lt.f32.partialorder %v1608, 0.0004427343
    %v1610 = vsel %vm1609, %v1607, %v1604
    %v1611 = vadd.f32 %v1575, 1.0
    %v1612 = vlog2.pop %v1611
    %v1613 = vmul.f32 %v1612, 0.6931472
    %v1614 = vmul.f32 -0.5, %v1575
    %v1615 = vadd.f32 %v1614, 1.0
    %v1616 = vmul.f32 %v1615, %v1575
    %v1617 = vand.u32 2147483647, %v1575
    %vm1618 = vcmp.lt.f32.partialorder %v1617, 0.0004427343
    %v1619 = vsel %vm1618, %v1616, %v1613
    %v1620 = vadd.f32 %v1577, 1.0
    %v1621 = vlog2.pop %v1620
    %v1622 = vmul.f32 %v1621, 0.6931472
    %v1623 = vmul.f32 -0.5, %v1577
    %v1624 = vadd.f32 %v1623, 1.0
    %v1625 = vmul.f32 %v1624, %v1577
    %v1626 = vand.u32 2147483647, %v1577
    %vm1627 = vcmp.lt.f32.partialorder %v1626, 0.0004427343
    %v1628 = vsel %vm1627, %v1625, %v1622
    %v1629 = vadd.f32 %v1579, 1.0
    %v1630 = vlog2.pop %v1629
    %v1631 = vmul.f32 %v1630, 0.6931472
    %v1632 = vmul.f32 -0.5, %v1579
    %v1633 = vadd.f32 %v1632, 1.0
    %v1634 = vmul.f32 %v1633, %v1579
    %v1635 = vand.u32 2147483647, %v1579
    %vm1636 = vcmp.lt.f32.partialorder %v1635, 0.0004427343
    %v1637 = vsel %vm1636, %v1634, %v1631
    %v1638 = vadd.f32 %v1581, 1.0
    %v1639 = vlog2.pop %v1638
    %v1640 = vmul.f32 %v1639, 0.6931472
    %v1641 = vmul.f32 -0.5, %v1581
    %v1642 = vadd.f32 %v1641, 1.0
    %v1643 = vmul.f32 %v1642, %v1581
    %v1644 = vand.u32 2147483647, %v1581
    %vm1645 = vcmp.lt.f32.partialorder %v1644, 0.0004427343
    %v1646 = vsel %vm1645, %v1643, %v1640
    %v1647 = vadd.f32 %v1583, 1.0
    %v1648 = vlog2.pop %v1647
    %v1649 = vmul.f32 %v1648, 0.6931472
    %v1650 = vmul.f32 -0.5, %v1583
    %v1651 = vadd.f32 %v1650, 1.0
    %v1652 = vmul.f32 %v1651, %v1583
    %v1653 = vand.u32 2147483647, %v1583
    %vm1654 = vcmp.lt.f32.partialorder %v1653, 0.0004427343
    %v1655 = vsel %vm1654, %v1652, %v1649
    %v1656 = vadd.f32 %v1528, %v1592
    %v1657 = vadd.f32 %v1529, %v1601
    %v1658 = vadd.f32 %v1530, %v1610
    %v1659 = vadd.f32 %v1531, %v1619
    %v1660 = vadd.f32 %v1532, %v1628
    %v1661 = vadd.f32 %v1533, %v1637
    %v1662 = vadd.f32 %v1534, %v1646
    %v1663 = vadd.f32 %v1535, %v1655
    %v1664 = vsel %vm1536, %v1544, %v1656
    %v1665 = vsel %vm1537, %v1545, %v1657
    %v1666 = vsel %vm1538, %v1546, %v1658
    %v1667 = vsel %vm1539, %v1547, %v1659
    %v1668 = vsel %vm1540, %v1548, %v1660
    %v1669 = vsel %vm1541, %v1549, %v1661
    %v1670 = vsel %vm1542, %v1550, %v1662
    %v1671 = vsel %vm1543, %v1551, %v1663
    %v1672 = vadd.f32 %v1664, 1e-06
    %v1673 = vadd.f32 %v1665, 1e-06
    %v1674 = vadd.f32 %v1666, 1e-06
    %v1675 = vadd.f32 %v1667, 1e-06
    %v1676 = vadd.f32 %v1668, 1e-06
    %v1677 = vadd.f32 %v1669, 1e-06
    %v1678 = vadd.f32 %v1670, 1e-06
    %v1679 = vadd.f32 %v1671, 1e-06
    %vm1680 = vcmask 64512
    %v1681 = vsel %vm1680, %v1520, %v1672
    %v1682 = vsel %vm1680, %v1521, %v1673
    %v1683 = vsel %vm1680, %v1522, %v1674
    %v1684 = vsel %vm1680, %v1523, %v1675
    %v1685 = vsel %vm1680, %v1524, %v1676
    %v1686 = vsel %vm1680, %v1525, %v1677
    %v1687 = vsel %vm1680, %v1526, %v1678
    %v1688 = vsel %vm1680, %v1527, %v1679
    %vm1689 = vcmask 130048
    %1690 = vst.msk [vmem:[#allocation13] sm:$0xff] %vm1689, %v1681
    %1691 = vst.msk [vmem:[#allocation13 + $0x8] sm:$0xff] %vm1689, %v1682
    %1692 = vst.msk [vmem:[#allocation13 + $0x10] sm:$0xff] %vm1689, %v1683
    %1693 = vst.msk [vmem:[#allocation13 + $0x18] sm:$0xff] %vm1689, %v1684
    %1694 = vst.msk [vmem:[#allocation13 + $0x20] sm:$0xff] %vm1689, %v1685
    %1695 = vst.msk [vmem:[#allocation13 + $0x28] sm:$0xff] %vm1689, %v1686
    %1696 = vst.msk [vmem:[#allocation13 + $0x30] sm:$0xff] %vm1689, %v1687
    %1697 = vst.msk [vmem:[#allocation13 + $0x38] sm:$0xff] %vm1689, %v1688
    // Predicated region
    $region74: #{tpu_custom_call.1} parent=1 // pred_check
      _
    $region75: #{tpu_custom_call.1} parent=1 // pred_check_branch
      %1699 = sbr.rel (0) target = $region77
    $region76: #{tpu_custom_call.1} parent=1 // pred_region
      %1701 = vsyncadd [#allocation6], 0
      %s1702 = sshll.u32 [#allocation13], 4
      %s1703 = int_to_ptr.vmem [resolvable:$true] %s1702
      %s1704 = sshll.u32 %s13, 4
      %s1705 = int_to_ptr.hbm [resolvable:$true] %s1704
      %1710 = dma.vmem_to_hbm [thread:$0]  %s1703, 1024, %s1705, [#allocation6], 128, 128, 8
    $region77: #{tpu_custom_call.1} parent=1 // pred_fallthru
      _
    // Predicated region
    $region78: #{tpu_custom_call.1} parent=1 // pred_check
      _
    $region79: #{tpu_custom_call.1} parent=1 // pred_check_branch
      %1712 = sbr.rel (0) target = $region81
    $region80: #{tpu_custom_call.1} parent=1 // pred_region
      %1714 = vsyncadd [#allocation15], 0
      %s1715 = sshll.u32 [#allocation14], 4
      %s1716 = int_to_ptr.vmem [resolvable:$true] %s1715
      %s1717 = sshll.u32 %s14, 4
      %s1718 = int_to_ptr.hbm [resolvable:$true] %s1717
      %1723 = dma.vmem_to_hbm [thread:$0]  %s1716, 256, %s1718, [#allocation15], 128, 128, 8
    $region81: #{tpu_custom_call.1} parent=1 // pred_fallthru
      _
    // Predicated region
    $region82: #{tpu_custom_call.1} parent=1 // pred_check
      _
    $region83: #{tpu_custom_call.1} parent=1 // pred_check_branch
      %1725 = sbr.rel (0) target = $region85
    $region84: #{tpu_custom_call.1} parent=1 // pred_region
      %1727 = dma.done [#allocation6], 1024
    $region85: #{tpu_custom_call.1} parent=1 // pred_fallthru
      _
    // Predicated region
    $region86: #{tpu_custom_call.1} parent=1 // pred_check
      _
    $region87: #{tpu_custom_call.1} parent=1 // pred_check_branch
      %1729 = sbr.rel (0) target = $region89
    $region88: #{tpu_custom_call.1} parent=1 // pred_region
      %1731 = dma.done [#allocation15], 256
    $region89: #{tpu_custom_call.1} parent=1 // pred_fallthru
      _
    %1732 = vsyncpa [#allocation5], 1
    %1733 = vsyncpa [#allocation8], 1
    %1734 = vsyncpa [#allocation11], 1
    %1735 = vsyncpa [#allocation6], 1
    %1736 = vsyncpa [#allocation15], 1

</llo_original>
